<compile_context>
chip_gen: v6e
topology: v6e:2x2x1
jax: 0.10.0
libtpu: 0.0.40
codegen_flags: <defaults>
</compile_context>

<pallas_src>
import math

import jax
import jax.numpy as jnp
import numpy as np
from jax.experimental import pallas as pl
from jax.experimental.pallas import tpu as pltpu

# ---------------- config ----------------
B = 2          # batch
C = 3          # input channels
IMG = 16       # image side
PATCH = 4      # patch side
NPATCH = (IMG // PATCH) ** 2          # 16 patches
PDIM = C * PATCH * PATCH              # 48 flattened patch
S = NPATCH + 1                        # 17 tokens (CLS + patches)
BS = B * S                            # 34 stacked tokens
D = 32                                # ViT embed dim
H = 2                                 # attention heads
DH = D // H                           # 16 head dim
HBS = H * BS                          # 68 head-stacked rows
DMLP = 4 * D                          # 128 MLP hidden
DEPTH = 2                             # transformer blocks
E = 64                                # fc output embed_dim
E_PAD = 128                           # lane-dense padded head width

LN_EPS = 1e-6
ATTN_SCALE = 1.0 / math.sqrt(DH)
NEG_INF = -1e30

# ---- bf16 weight blob layout: [WROWS, 128] ----
LAYER_W_ROWS = 3 * D + DMLP           # qkv(32) + proj(32) + mlp_w1(32) + mlp_w2(128) = 224
W_LAYER0 = PDIM                       # pe_w occupies rows [0:48]
W_FC = PDIM + DEPTH * LAYER_W_ROWS    # 496
WROWS = W_FC + D                      # 528

# ---- f32 bias/LN/pos/mask blob layout: [FROWS, 128] ----
F_CLS = 0                             # cls + pos[0]
F_POSB = 1                            # pos[1:] + pe_b  (NPATCH rows)
F_LAYER0 = 1 + NPATCH                 # 17
LAYER_F_ROWS = 8                      # ln1_g, ln1_b, qkv_b, proj_b, ln2_g, ln2_b, mlp_b1, mlp_b2
F_LNF_G = F_LAYER0 + DEPTH * LAYER_F_ROWS   # 33
F_LNF_B = F_LNF_G + 1                 # 34
F_FC_B = F_LNF_B + 1                  # 35
F_BIAS = 40                           # (sample, head)-block-diag attention bias, HBS rows
FROWS = F_BIAS + HBS                  # 108


# ---------------- Pallas kernel ----------------
def vit_encoder_kernel(xp_ref, wb_ref, fb_ref, out_ref):
    f32 = jnp.float32
    bf16 = jnp.bfloat16

    def ln(x, g, b):
        mu = jnp.mean(x, axis=-1, keepdims=True)
        var = jnp.mean((x - mu) ** 2, axis=-1, keepdims=True)
        return (x - mu) * jax.lax.rsqrt(var + LN_EPS) * g + b

    def mm(a, w):  # bf16 MXU operands, f32 accumulation
        return jnp.dot(a.astype(bf16), w, preferred_element_type=f32)

    # ----- patch embedding: [B*NPATCH, PDIM] @ [PDIM, D] -----
    pe = mm(xp_ref[...], wb_ref[0:PDIM, 0:D])                     # [B*NPATCH, D] f32

    # ----- token assembly, CLS-first layout -----
    cls_row = fb_ref[F_CLS:F_CLS + 1, 0:D]                        # cls + pos[0], [1, D]
    posb = fb_ref[F_POSB:F_POSB + NPATCH, 0:D]                    # pos[1:] + pe_b, [NPATCH, D]
    cls_rows = jnp.broadcast_to(cls_row, (B, D))                  # [B, D]
    posb_full = jnp.concatenate([posb] * B, axis=0)               # [B*NPATCH, D]
    tok = jnp.concatenate([cls_rows, pe + posb_full], axis=0)     # [BS, D] f32

    # (sample, head)-block-diagonal additive bias, precomputed on host
    attn_bias = fb_ref[F_BIAS:F_BIAS + HBS, 0:HBS]                # [HBS, HBS] f32

    # ----- transformer blocks (statically unrolled) -----
    for l in range(DEPTH):
        wl = W_LAYER0 + l * LAYER_W_ROWS
        fl = F_LAYER0 + l * LAYER_F_ROWS

        # --- attention ---
        h = ln(tok, fb_ref[fl + 0:fl + 1, 0:D], fb_ref[fl + 1:fl + 2, 0:D])
        qkv = mm(h, wb_ref[wl:wl + D, 0:3 * D]) + fb_ref[fl + 2:fl + 3, 0:3 * D]  # [BS, 3D]
        q = qkv[:, 0:D]
        k = qkv[:, D:2 * D]
        v = qkv[:, 2 * D:3 * D]

        # stack heads along sublanes: one score matmul / softmax / P@V for all heads+samples
        qs = jnp.concatenate([q[:, hh * DH:(hh + 1) * DH] for hh in range(H)], 0).astype(bf16)
        ks = jnp.concatenate([k[:, hh * DH:(hh + 1) * DH] for hh in range(H)], 0).astype(bf16)
        vs = jnp.concatenate([v[:, hh * DH:(hh + 1) * DH] for hh in range(H)], 0).astype(bf16)

        s = jax.lax.dot_general(qs, ks, (((1,), (1,)), ((), ())),
                                preferred_element_type=f32)        # [HBS, HBS]
        s = s * ATTN_SCALE + attn_bias
        s = s - jnp.max(s, axis=-1, keepdims=True)
        p = jnp.exp(s)
        p = p * pl.reciprocal(jnp.sum(p, axis=-1, keepdims=True), approx=True)
        ctx = mm(p, vs)                                            # [HBS, DH]

        # recombine heads along lanes -> single K=32 output projection
        ctx_full = jnp.concatenate([ctx[hh * BS:(hh + 1) * BS, :] for hh in range(H)],
                                   axis=-1)                        # [BS, D]
        att = mm(ctx_full, wb_ref[wl + D:wl + 2 * D, 0:D]) + fb_ref[fl + 3:fl + 4, 0:D]
        tok = tok + att

        # --- MLP ---
        h2 = ln(tok, fb_ref[fl + 4:fl + 5, 0:D], fb_ref[fl + 5:fl + 6, 0:D])
        m = mm(h2, wb_ref[wl + 2 * D:wl + 3 * D, 0:DMLP]) + fb_ref[fl + 6:fl + 7, 0:DMLP]
        m = jax.nn.gelu(m, approximate=True)                       # tanh-GELU (EUP friendly)
        tok = (tok + mm(m, wb_ref[wl + 3 * D:wl + 3 * D + DMLP, 0:D])
               + fb_ref[fl + 7:fl + 8, 0:D])

    # ----- CLS pooling (rows 0:B) -> final LN -> fc head, lane-dense [B, E_PAD] store -----
    cls_tok = tok[0:B, :]
    cls_n = ln(cls_tok, fb_ref[F_LNF_G:F_LNF_G + 1, 0:D], fb_ref[F_LNF_B:F_LNF_B + 1, 0:D])
    out_ref[...] = (mm(cls_n, wb_ref[W_FC:W_FC + D, 0:E_PAD])
                    + fb_ref[F_FC_B:F_FC_B + 1, 0:E_PAD])


# ---------------- host-side prep (done once, outside the per-call path) ----------------
def extract_patches(x):
    # x: [B, C, IMG, IMG] NCHW -> [B, NPATCH, C*PATCH*PATCH] in (c, ph, pw) order.
    gp = IMG // PATCH
    xp = x.reshape(B, C, gp, PATCH, gp, PATCH)
    xp = xp.transpose(0, 2, 4, 1, 3, 5)
    return xp.reshape(B, NPATCH, PDIM)


def build_attn_bias():
    sample = np.empty((BS,), np.int32)
    sample[:B] = np.arange(B)
    sample[B:] = np.repeat(np.arange(B), NPATCH)
    sample = np.tile(sample, H)                 # [HBS] sample id per head-stacked row
    head = np.repeat(np.arange(H), BS)          # [HBS] head id
    same = (sample[:, None] == sample[None, :]) & (head[:, None] == head[None, :])
    return np.where(same, 0.0, NEG_INF).astype(np.float32)


def prep_blobs(params):
    """Canonical params -> (bf16 weight blob, f32 bias/LN/pos/mask blob)."""
    p = {k: np.asarray(v, np.float32) for k, v in params.items()}

    wb = np.zeros((WROWS, 128), np.float32)
    wb[0:PDIM, 0:D] = p["pe_w"]
    for l in range(DEPTH):
        base = W_LAYER0 + l * LAYER_W_ROWS
        wb[base:base + D, 0:3 * D] = p["qkv_w"][l]                  # [32, 96]
        wb[base + D:base + 2 * D, 0:D] = p["proj_w"][l]             # [32, 32]
        wb[base + 2 * D:base + 3 * D, 0:DMLP] = p["mlp_w1"][l]      # [32, 128]
        wb[base + 3 * D:base + 3 * D + DMLP, 0:D] = p["mlp_w2"][l]  # [128, 32]
    wb[W_FC:W_FC + D, 0:E] = p["fc_w"]                              # padded to 128 lanes

    fb = np.zeros((FROWS, 128), np.float32)
    fb[F_CLS, 0:D] = p["cls"][0] + p["pos"][0]
    fb[F_POSB:F_POSB + NPATCH, 0:D] = p["pos"][1:] + p["pe_b"]
    for l in range(DEPTH):
        base = F_LAYER0 + l * LAYER_F_ROWS
        fb[base + 0, 0:D] = p["ln1_g"][l, 0]
        fb[base + 1, 0:D] = p["ln1_b"][l, 0]
        fb[base + 2, 0:3 * D] = p["qkv_b"][l, 0]
        fb[base + 3, 0:D] = p["proj_b"][l, 0]
        fb[base + 4, 0:D] = p["ln2_g"][l, 0]
        fb[base + 5, 0:D] = p["ln2_b"][l, 0]
        fb[base + 6, 0:DMLP] = p["mlp_b1"][l, 0]
        fb[base + 7, 0:D] = p["mlp_b2"][l, 0]
    fb[F_LNF_G, 0:D] = p["lnf_g"][0]
    fb[F_LNF_B, 0:D] = p["lnf_b"][0]
    fb[F_FC_B, 0:E] = p["fc_b"][0]
    fb[F_BIAS:F_BIAS + HBS, 0:HBS] = build_attn_bias()

    return jnp.asarray(wb, jnp.bfloat16), jnp.asarray(fb, jnp.float32)


def _cost_estimate():
    flops = 2 * (B * NPATCH) * PDIM * D
    per_layer = (2 * BS * D * (3 * D)            # fused qkv
                 + 2 * 2 * HBS * HBS * DH        # scores + P@V (heads merged)
                 + 2 * BS * D * D                # output projection
                 + 2 * 2 * BS * D * DMLP)        # mlp
    flops += DEPTH * per_layer + 2 * B * D * E_PAD
    transcendentals = DEPTH * (HBS * HBS + HBS + BS * DMLP + 2 * BS) + B
    bytes_accessed = (B * NPATCH * PDIM * 2 + WROWS * 128 * 2
                      + FROWS * 128 * 4 + B * E_PAD * 4)
    return pl.CostEstimate(flops=int(flops),
                           transcendentals=int(transcendentals),
                           bytes_accessed=int(bytes_accessed))


# ---------------- wrapper (jitted; gridless pallas_call, 3 input DMAs) ----------------
def _vit_forward(x, wblob, fblob):
    xp = extract_patches(x).reshape(B * NPATCH, PDIM).astype(jnp.bfloat16)
    vmem_spec = pl.BlockSpec(memory_space=pltpu.MemorySpace.VMEM)
    out = pl.pallas_call(
        vit_encoder_kernel,
        out_shape=jax.ShapeDtypeStruct((B, E_PAD), jnp.float32),
        in_specs=[vmem_spec, vmem_spec, vmem_spec],
        out_specs=vmem_spec,
        cost_estimate=_cost_estimate(),
    )(xp, wblob, fblob)
    return out[:, :E]


vit_forward = jax.jit(_vit_forward)


# ---------------- deterministic parameter init (synthetic, no checkpoint) ----------------
def init_params(key):
    ks = jax.random.split(key, 24)
    n = lambda k, shape, s=0.02: (s * jax.random.normal(k, shape)).astype(jnp.float32)
    return {
        "cls":    n(ks[0], (1, D)),
        "pos":    n(ks[1], (S, D)),
        "pe_w":   n(ks[2], (PDIM, D)),
        "pe_b":   jnp.zeros((1, D), jnp.float32),
        "ln1_g":  jnp.ones((DEPTH, 1, D), jnp.float32),
        "ln1_b":  jnp.zeros((DEPTH, 1, D), jnp.float32),
        "qkv_w":  n(ks[3], (DEPTH, D, 3 * D)),
        "qkv_b":  n(ks[4], (DEPTH, 1, 3 * D), 0.01),
        "proj_w": n(ks[5], (DEPTH, D, D)),
        "proj_b": n(ks[6], (DEPTH, 1, D), 0.01),
        "ln2_g":  jnp.ones((DEPTH, 1, D), jnp.float32),
        "ln2_b":  jnp.zeros((DEPTH, 1, D), jnp.float32),
        "mlp_w1": n(ks[7], (DEPTH, D, DMLP)),
        "mlp_b1": n(ks[8], (DEPTH, 1, DMLP), 0.01),
        "mlp_w2": n(ks[9], (DEPTH, DMLP, D)),
        "mlp_b2": n(ks[10], (DEPTH, 1, D), 0.01),
        "lnf_g":  jnp.ones((1, D), jnp.float32),
        "lnf_b":  jnp.zeros((1, D), jnp.float32),
        "fc_w":   n(ks[11], (D, E)),
        "fc_b":   n(ks[12], (1, E), 0.01),
    }


# ---------------- pure-JAX reference (for verification) ----------------
def ref_forward_single(xp, p):
    def ln(x, g, b):
        mu = jnp.mean(x, axis=-1, keepdims=True)
        var = jnp.mean((x - mu) ** 2, axis=-1, keepdims=True)
        return (x - mu) * jax.lax.rsqrt(var + LN_EPS) * g + b

    tok = jnp.concatenate([p["cls"], xp @ p["pe_w"] + p["pe_b"]], axis=0) + p["pos"]
    for l in range(DEPTH):
        h = ln(tok, p["ln1_g"][l], p["ln1_b"][l])
        qkv = h @ p["qkv_w"][l] + p["qkv_b"][l]
        q, k, v = qkv[:, :D], qkv[:, D:2 * D], qkv[:, 2 * D:]
        outs = []
        for hh in range(H):
            sl = slice(hh * DH, (hh + 1) * DH)
            s = (q[:, sl] @ k[:, sl].T) * ATTN_SCALE
            pmat = jax.nn.softmax(s, axis=-1)
            outs.append(pmat @ v[:, sl])
        att = jnp.concatenate(outs, axis=-1) @ p["proj_w"][l] + p["proj_b"][l]
        tok = tok + att
        h2 = ln(tok, p["ln2_g"][l], p["ln2_b"][l])
        m = jax.nn.gelu(h2 @ p["mlp_w1"][l] + p["mlp_b1"][l], approximate=True)
        tok = tok + (m @ p["mlp_w2"][l] + p["mlp_b2"][l])
    tok = ln(tok, p["lnf_g"], p["lnf_b"])
    return (tok[0:1, :] @ p["fc_w"] + p["fc_b"])[0]


if __name__ == "__main__":
    key = jax.random.PRNGKey(0)
    k_param, k_x = jax.random.split(key)
    params = init_params(k_param)
    wblob, fblob = prep_blobs(params)          # one-time parameter prep (not per call)

    x = jax.random.normal(k_x, (B, C, IMG, IMG), dtype=jnp.float32)  # NCHW

    out = vit_forward(x, wblob, fblob)
    out = jax.block_until_ready(out)
    assert out.shape == (B, E), out.shape

    xp = extract_patches(x)
    ref = jax.vmap(lambda xi: ref_forward_single(xi, params))(xp)
    ref = jax.block_until_ready(ref)

    if not np.allclose(np.asarray(out), np.asarray(ref), atol=2e-2, rtol=2e-2):
        raise AssertionError(
            f"kernel/reference mismatch: max abs diff = "
            f"{float(np.max(np.abs(np.asarray(out) - np.asarray(ref))))}")

    print("KERNEL_OK")
</pallas_src>

<mosaic_0001>
module attributes {stable_mosaic.version = 11 : i64} {
  func.func @vit_encoder_kernel(%arg0: memref<32x48xbf16, #tpu.memory_space<vmem>>, %arg1: memref<528x128xbf16, #tpu.memory_space<vmem>>, %arg2: memref<108x128xf32, #tpu.memory_space<vmem>>, %arg3: memref<2x128xf32, #tpu.memory_space<vmem>>) attributes {dimension_semantics = [], scalar_prefetch = 0 : i64, scratch_operands = 0 : i64, tpu.core_type = #tpu.core_type<tc>} {
    %c0 = arith.constant 0 : index
    %c0_0 = arith.constant 0 : index
    %0 = vector.load %arg0[%c0, %c0_0] : memref<32x48xbf16, #tpu.memory_space<vmem>>, vector<32x48xbf16>
    %c0_1 = arith.constant 0 : index
    %c0_2 = arith.constant 0 : index
    %1 = vector.load %arg1[%c0_1, %c0_2] : memref<528x128xbf16, #tpu.memory_space<vmem>>, vector<48x32xbf16>
    %cst = arith.constant dense<0.000000e+00> : vector<32x32xf32>
    %2 = tpu.matmul %0, %1, %cst {dimension_numbers = #tpu.dot_dimension_numbers<[1], [0], [0], [1], [0, 0, 1, 1], [], []>} : vector<32x48xbf16>, vector<48x32xbf16>, vector<32x32xf32> -> vector<32x32xf32>
    %c0_3 = arith.constant 0 : index
    %c0_4 = arith.constant 0 : index
    %3 = vector.load %arg2[%c0_3, %c0_4] : memref<108x128xf32, #tpu.memory_space<vmem>>, vector<1x32xf32>
    %c1 = arith.constant 1 : index
    %c0_5 = arith.constant 0 : index
    %4 = vector.load %arg2[%c1, %c0_5] : memref<108x128xf32, #tpu.memory_space<vmem>>, vector<16x32xf32>
    %5 = vector.shape_cast %3 : vector<1x32xf32> to vector<1x32xf32>
    %6 = vector.broadcast %5 : vector<1x32xf32> to vector<2x32xf32>
    %7 = tpu.concatenate %4, %4 in 0 : vector<16x32xf32>, vector<16x32xf32> -> vector<32x32xf32>
    %8 = arith.addf %2, %7 : vector<32x32xf32>
    %9 = tpu.concatenate %6, %8 in 0 : vector<2x32xf32>, vector<32x32xf32> -> vector<34x32xf32>
    %c40 = arith.constant 40 : index
    %c0_6 = arith.constant 0 : index
    %10 = vector.load %arg2[%c40, %c0_6] : memref<108x128xf32, #tpu.memory_space<vmem>>, vector<68x68xf32>
    %c17 = arith.constant 17 : index
    %c0_7 = arith.constant 0 : index
    %11 = vector.load %arg2[%c17, %c0_7] : memref<108x128xf32, #tpu.memory_space<vmem>>, vector<1x32xf32>
    %c18 = arith.constant 18 : index
    %c0_8 = arith.constant 0 : index
    %12 = vector.load %arg2[%c18, %c0_8] : memref<108x128xf32, #tpu.memory_space<vmem>>, vector<1x32xf32>
    %cst_9 = arith.constant dense<0.000000e+00> : vector<34xf32>
    %13 = vector.multi_reduction <add>, %9, %cst_9 [1] : vector<34x32xf32> to vector<34xf32>
    %14 = vector.shape_cast %13 : vector<34xf32> to vector<34x1xf32>
    %cst_10 = arith.constant 3.200000e+01 : f32
    %15 = vector.broadcast %cst_10 : f32 to vector<34x1xf32>
    %16 = arith.divf %14, %15 : vector<34x1xf32>
    %17 = vector.broadcast %16 : vector<34x1xf32> to vector<34x32xf32>
    %18 = arith.subf %9, %17 : vector<34x32xf32>
    %19 = arith.mulf %18, %18 : vector<34x32xf32>
    %cst_11 = arith.constant dense<0.000000e+00> : vector<34xf32>
    %20 = vector.multi_reduction <add>, %19, %cst_11 [1] : vector<34x32xf32> to vector<34xf32>
    %21 = vector.shape_cast %20 : vector<34xf32> to vector<34x1xf32>
    %cst_12 = arith.constant 3.200000e+01 : f32
    %22 = vector.broadcast %cst_12 : f32 to vector<34x1xf32>
    %23 = arith.divf %21, %22 : vector<34x1xf32>
    %24 = vector.broadcast %16 : vector<34x1xf32> to vector<34x32xf32>
    %25 = arith.subf %9, %24 : vector<34x32xf32>
    %cst_13 = arith.constant 9.99999997E-7 : f32
    %26 = vector.broadcast %cst_13 : f32 to vector<34x1xf32>
    %27 = arith.addf %23, %26 : vector<34x1xf32>
    %28 = math.rsqrt %27 : vector<34x1xf32>
    %29 = vector.broadcast %28 : vector<34x1xf32> to vector<34x32xf32>
    %30 = arith.mulf %25, %29 : vector<34x32xf32>
    %31 = vector.broadcast %11 : vector<1x32xf32> to vector<34x32xf32>
    %32 = arith.mulf %30, %31 : vector<34x32xf32>
    %33 = vector.broadcast %12 : vector<1x32xf32> to vector<34x32xf32>
    %34 = arith.addf %32, %33 : vector<34x32xf32>
    %c48 = arith.constant 48 : index
    %c0_14 = arith.constant 0 : index
    %35 = vector.load %arg1[%c48, %c0_14] : memref<528x128xbf16, #tpu.memory_space<vmem>>, vector<32x96xbf16>
    %36 = arith.truncf %34 : vector<34x32xf32> to vector<34x32xbf16>
    %cst_15 = arith.constant dense<0.000000e+00> : vector<34x96xf32>
    %37 = tpu.matmul %36, %35, %cst_15 {dimension_numbers = #tpu.dot_dimension_numbers<[1], [0], [0], [1], [0, 0, 1, 1], [], []>} : vector<34x32xbf16>, vector<32x96xbf16>, vector<34x96xf32> -> vector<34x96xf32>
    %c19 = arith.constant 19 : index
    %c0_16 = arith.constant 0 : index
    %38 = vector.load %arg2[%c19, %c0_16] : memref<108x128xf32, #tpu.memory_space<vmem>>, vector<1x96xf32>
    %39 = vector.broadcast %38 : vector<1x96xf32> to vector<34x96xf32>
    %40 = arith.addf %37, %39 : vector<34x96xf32>
    %41 = vector.extract_strided_slice %40 {offsets = [0, 0], sizes = [34, 32], strides = [1, 1]} : vector<34x96xf32> to vector<34x32xf32>
    %42 = vector.extract_strided_slice %40 {offsets = [0, 32], sizes = [34, 32], strides = [1, 1]} : vector<34x96xf32> to vector<34x32xf32>
    %43 = vector.extract_strided_slice %40 {offsets = [0, 64], sizes = [34, 32], strides = [1, 1]} : vector<34x96xf32> to vector<34x32xf32>
    %44 = vector.extract_strided_slice %41 {offsets = [0, 0], sizes = [34, 16], strides = [1, 1]} : vector<34x32xf32> to vector<34x16xf32>
    %45 = vector.extract_strided_slice %41 {offsets = [0, 16], sizes = [34, 16], strides = [1, 1]} : vector<34x32xf32> to vector<34x16xf32>
    %46 = tpu.concatenate %44, %45 in 0 : vector<34x16xf32>, vector<34x16xf32> -> vector<68x16xf32>
    %47 = arith.truncf %46 : vector<68x16xf32> to vector<68x16xbf16>
    %48 = vector.extract_strided_slice %42 {offsets = [0, 0], sizes = [34, 16], strides = [1, 1]} : vector<34x32xf32> to vector<34x16xf32>
    %49 = vector.extract_strided_slice %42 {offsets = [0, 16], sizes = [34, 16], strides = [1, 1]} : vector<34x32xf32> to vector<34x16xf32>
    %50 = tpu.concatenate %48, %49 in 0 : vector<34x16xf32>, vector<34x16xf32> -> vector<68x16xf32>
    %51 = arith.truncf %50 : vector<68x16xf32> to vector<68x16xbf16>
    %52 = vector.extract_strided_slice %43 {offsets = [0, 0], sizes = [34, 16], strides = [1, 1]} : vector<34x32xf32> to vector<34x16xf32>
    %53 = vector.extract_strided_slice %43 {offsets = [0, 16], sizes = [34, 16], strides = [1, 1]} : vector<34x32xf32> to vector<34x16xf32>
    %54 = tpu.concatenate %52, %53 in 0 : vector<34x16xf32>, vector<34x16xf32> -> vector<68x16xf32>
    %55 = arith.truncf %54 : vector<68x16xf32> to vector<68x16xbf16>
    %cst_17 = arith.constant dense<0.000000e+00> : vector<68x68xf32>
    %56 = tpu.matmul %47, %51, %cst_17 {dimension_numbers = #tpu.dot_dimension_numbers<[1], [1], [0], [0], [0, 0, 1, 0], [], []>} : vector<68x16xbf16>, vector<68x16xbf16>, vector<68x68xf32> -> vector<68x68xf32>
    %cst_18 = arith.constant 2.500000e-01 : f32
    %57 = vector.broadcast %cst_18 : f32 to vector<68x68xf32>
    %58 = arith.mulf %56, %57 : vector<68x68xf32>
    %59 = arith.addf %58, %10 : vector<68x68xf32>
    %cst_19 = arith.constant dense<0xFF800000> : vector<68xf32>
    %60 = vector.multi_reduction <maximumf>, %59, %cst_19 [1] : vector<68x68xf32> to vector<68xf32>
    %61 = vector.shape_cast %60 : vector<68xf32> to vector<68x1xf32>
    %62 = vector.broadcast %61 : vector<68x1xf32> to vector<68x68xf32>
    %63 = arith.subf %59, %62 : vector<68x68xf32>
    %64 = math.exp %63 : vector<68x68xf32>
    %cst_20 = arith.constant dense<0.000000e+00> : vector<68xf32>
    %65 = vector.multi_reduction <add>, %64, %cst_20 [1] : vector<68x68xf32> to vector<68xf32>
    %66 = vector.shape_cast %65 : vector<68xf32> to vector<68x1xf32>
    %67 = tpu.reciprocal %66 {approx = true} : vector<68x1xf32> -> vector<68x1xf32>
    %68 = vector.broadcast %67 : vector<68x1xf32> to vector<68x68xf32>
    %69 = arith.mulf %64, %68 : vector<68x68xf32>
    %70 = arith.truncf %69 : vector<68x68xf32> to vector<68x68xbf16>
    %cst_21 = arith.constant dense<0.000000e+00> : vector<68x16xf32>
    %71 = tpu.matmul %70, %55, %cst_21 {dimension_numbers = #tpu.dot_dimension_numbers<[1], [0], [0], [1], [0, 0, 1, 1], [], []>} : vector<68x68xbf16>, vector<68x16xbf16>, vector<68x16xf32> -> vector<68x16xf32>
    %72 = vector.extract_strided_slice %71 {offsets = [0, 0], sizes = [34, 16], strides = [1, 1]} : vector<68x16xf32> to vector<34x16xf32>
    %73 = vector.extract_strided_slice %71 {offsets = [34, 0], sizes = [34, 16], strides = [1, 1]} : vector<68x16xf32> to vector<34x16xf32>
    %74 = tpu.concatenate %72, %73 in 1 : vector<34x16xf32>, vector<34x16xf32> -> vector<34x32xf32>
    %c80 = arith.constant 80 : index
    %c0_22 = arith.constant 0 : index
    %75 = vector.load %arg1[%c80, %c0_22] : memref<528x128xbf16, #tpu.memory_space<vmem>>, vector<32x32xbf16>
    %76 = arith.truncf %74 : vector<34x32xf32> to vector<34x32xbf16>
    %cst_23 = arith.constant dense<0.000000e+00> : vector<34x32xf32>
    %77 = tpu.matmul %76, %75, %cst_23 {dimension_numbers = #tpu.dot_dimension_numbers<[1], [0], [0], [1], [0, 0, 1, 1], [], []>} : vector<34x32xbf16>, vector<32x32xbf16>, vector<34x32xf32> -> vector<34x32xf32>
    %c20 = arith.constant 20 : index
    %c0_24 = arith.constant 0 : index
    %78 = vector.load %arg2[%c20, %c0_24] : memref<108x128xf32, #tpu.memory_space<vmem>>, vector<1x32xf32>
    %79 = vector.broadcast %78 : vector<1x32xf32> to vector<34x32xf32>
    %80 = arith.addf %77, %79 : vector<34x32xf32>
    %81 = arith.addf %9, %80 : vector<34x32xf32>
    %c21 = arith.constant 21 : index
    %c0_25 = arith.constant 0 : index
    %82 = vector.load %arg2[%c21, %c0_25] : memref<108x128xf32, #tpu.memory_space<vmem>>, vector<1x32xf32>
    %c22 = arith.constant 22 : index
    %c0_26 = arith.constant 0 : index
    %83 = vector.load %arg2[%c22, %c0_26] : memref<108x128xf32, #tpu.memory_space<vmem>>, vector<1x32xf32>
    %cst_27 = arith.constant dense<0.000000e+00> : vector<34xf32>
    %84 = vector.multi_reduction <add>, %81, %cst_27 [1] : vector<34x32xf32> to vector<34xf32>
    %85 = vector.shape_cast %84 : vector<34xf32> to vector<34x1xf32>
    %cst_28 = arith.constant 3.200000e+01 : f32
    %86 = vector.broadcast %cst_28 : f32 to vector<34x1xf32>
    %87 = arith.divf %85, %86 : vector<34x1xf32>
    %88 = vector.broadcast %87 : vector<34x1xf32> to vector<34x32xf32>
    %89 = arith.subf %81, %88 : vector<34x32xf32>
    %90 = arith.mulf %89, %89 : vector<34x32xf32>
    %cst_29 = arith.constant dense<0.000000e+00> : vector<34xf32>
    %91 = vector.multi_reduction <add>, %90, %cst_29 [1] : vector<34x32xf32> to vector<34xf32>
    %92 = vector.shape_cast %91 : vector<34xf32> to vector<34x1xf32>
    %cst_30 = arith.constant 3.200000e+01 : f32
    %93 = vector.broadcast %cst_30 : f32 to vector<34x1xf32>
    %94 = arith.divf %92, %93 : vector<34x1xf32>
    %95 = vector.broadcast %87 : vector<34x1xf32> to vector<34x32xf32>
    %96 = arith.subf %81, %95 : vector<34x32xf32>
    %cst_31 = arith.constant 9.99999997E-7 : f32
    %97 = vector.broadcast %cst_31 : f32 to vector<34x1xf32>
    %98 = arith.addf %94, %97 : vector<34x1xf32>
    %99 = math.rsqrt %98 : vector<34x1xf32>
    %100 = vector.broadcast %99 : vector<34x1xf32> to vector<34x32xf32>
    %101 = arith.mulf %96, %100 : vector<34x32xf32>
    %102 = vector.broadcast %82 : vector<1x32xf32> to vector<34x32xf32>
    %103 = arith.mulf %101, %102 : vector<34x32xf32>
    %104 = vector.broadcast %83 : vector<1x32xf32> to vector<34x32xf32>
    %105 = arith.addf %103, %104 : vector<34x32xf32>
    %c112 = arith.constant 112 : index
    %c0_32 = arith.constant 0 : index
    %106 = vector.load %arg1[%c112, %c0_32] : memref<528x128xbf16, #tpu.memory_space<vmem>>, vector<32x128xbf16>
    %107 = arith.truncf %105 : vector<34x32xf32> to vector<34x32xbf16>
    %cst_33 = arith.constant dense<0.000000e+00> : vector<34x128xf32>
    %108 = tpu.matmul %107, %106, %cst_33 {dimension_numbers = #tpu.dot_dimension_numbers<[1], [0], [0], [1], [0, 0, 1, 1], [], []>} : vector<34x32xbf16>, vector<32x128xbf16>, vector<34x128xf32> -> vector<34x128xf32>
    %c23 = arith.constant 23 : index
    %c0_34 = arith.constant 0 : index
    %109 = vector.load %arg2[%c23, %c0_34] : memref<108x128xf32, #tpu.memory_space<vmem>>, vector<1x128xf32>
    %110 = vector.broadcast %109 : vector<1x128xf32> to vector<34x128xf32>
    %111 = arith.addf %108, %110 : vector<34x128xf32>
    %112 = arith.mulf %111, %111 : vector<34x128xf32>
    %113 = arith.mulf %111, %112 : vector<34x128xf32>
    %cst_35 = arith.constant 4.471500e-02 : f32
    %114 = vector.broadcast %cst_35 : f32 to vector<34x128xf32>
    %115 = arith.mulf %114, %113 : vector<34x128xf32>
    %116 = arith.addf %111, %115 : vector<34x128xf32>
    %cst_36 = arith.constant 0.797884583 : f32
    %117 = vector.broadcast %cst_36 : f32 to vector<34x128xf32>
    %118 = arith.mulf %117, %116 : vector<34x128xf32>
    %119 = math.tanh %118 : vector<34x128xf32>
    %cst_37 = arith.constant 1.000000e+00 : f32
    %120 = vector.broadcast %cst_37 : f32 to vector<34x128xf32>
    %121 = arith.addf %120, %119 : vector<34x128xf32>
    %cst_38 = arith.constant 5.000000e-01 : f32
    %122 = vector.broadcast %cst_38 : f32 to vector<34x128xf32>
    %123 = arith.mulf %122, %121 : vector<34x128xf32>
    %124 = arith.mulf %111, %123 : vector<34x128xf32>
    %c144 = arith.constant 144 : index
    %c0_39 = arith.constant 0 : index
    %125 = vector.load %arg1[%c144, %c0_39] : memref<528x128xbf16, #tpu.memory_space<vmem>>, vector<128x32xbf16>
    %126 = arith.truncf %124 : vector<34x128xf32> to vector<34x128xbf16>
    %cst_40 = arith.constant dense<0.000000e+00> : vector<34x32xf32>
    %127 = tpu.matmul %126, %125, %cst_40 {dimension_numbers = #tpu.dot_dimension_numbers<[1], [0], [0], [1], [0, 0, 1, 1], [], []>} : vector<34x128xbf16>, vector<128x32xbf16>, vector<34x32xf32> -> vector<34x32xf32>
    %128 = arith.addf %81, %127 : vector<34x32xf32>
    %c24 = arith.constant 24 : index
    %c0_41 = arith.constant 0 : index
    %129 = vector.load %arg2[%c24, %c0_41] : memref<108x128xf32, #tpu.memory_space<vmem>>, vector<1x32xf32>
    %130 = vector.broadcast %129 : vector<1x32xf32> to vector<34x32xf32>
    %131 = arith.addf %128, %130 : vector<34x32xf32>
    %c25 = arith.constant 25 : index
    %c0_42 = arith.constant 0 : index
    %132 = vector.load %arg2[%c25, %c0_42] : memref<108x128xf32, #tpu.memory_space<vmem>>, vector<1x32xf32>
    %c26 = arith.constant 26 : index
    %c0_43 = arith.constant 0 : index
    %133 = vector.load %arg2[%c26, %c0_43] : memref<108x128xf32, #tpu.memory_space<vmem>>, vector<1x32xf32>
    %cst_44 = arith.constant dense<0.000000e+00> : vector<34xf32>
    %134 = vector.multi_reduction <add>, %131, %cst_44 [1] : vector<34x32xf32> to vector<34xf32>
    %135 = vector.shape_cast %134 : vector<34xf32> to vector<34x1xf32>
    %cst_45 = arith.constant 3.200000e+01 : f32
    %136 = vector.broadcast %cst_45 : f32 to vector<34x1xf32>
    %137 = arith.divf %135, %136 : vector<34x1xf32>
    %138 = vector.broadcast %137 : vector<34x1xf32> to vector<34x32xf32>
    %139 = arith.subf %131, %138 : vector<34x32xf32>
    %140 = arith.mulf %139, %139 : vector<34x32xf32>
    %cst_46 = arith.constant dense<0.000000e+00> : vector<34xf32>
    %141 = vector.multi_reduction <add>, %140, %cst_46 [1] : vector<34x32xf32> to vector<34xf32>
    %142 = vector.shape_cast %141 : vector<34xf32> to vector<34x1xf32>
    %cst_47 = arith.constant 3.200000e+01 : f32
    %143 = vector.broadcast %cst_47 : f32 to vector<34x1xf32>
    %144 = arith.divf %142, %143 : vector<34x1xf32>
    %145 = vector.broadcast %137 : vector<34x1xf32> to vector<34x32xf32>
    %146 = arith.subf %131, %145 : vector<34x32xf32>
    %cst_48 = arith.constant 9.99999997E-7 : f32
    %147 = vector.broadcast %cst_48 : f32 to vector<34x1xf32>
    %148 = arith.addf %144, %147 : vector<34x1xf32>
    %149 = math.rsqrt %148 : vector<34x1xf32>
    %150 = vector.broadcast %149 : vector<34x1xf32> to vector<34x32xf32>
    %151 = arith.mulf %146, %150 : vector<34x32xf32>
    %152 = vector.broadcast %132 : vector<1x32xf32> to vector<34x32xf32>
    %153 = arith.mulf %151, %152 : vector<34x32xf32>
    %154 = vector.broadcast %133 : vector<1x32xf32> to vector<34x32xf32>
    %155 = arith.addf %153, %154 : vector<34x32xf32>
    %c272 = arith.constant 272 : index
    %c0_49 = arith.constant 0 : index
    %156 = vector.load %arg1[%c272, %c0_49] : memref<528x128xbf16, #tpu.memory_space<vmem>>, vector<32x96xbf16>
    %157 = arith.truncf %155 : vector<34x32xf32> to vector<34x32xbf16>
    %cst_50 = arith.constant dense<0.000000e+00> : vector<34x96xf32>
    %158 = tpu.matmul %157, %156, %cst_50 {dimension_numbers = #tpu.dot_dimension_numbers<[1], [0], [0], [1], [0, 0, 1, 1], [], []>} : vector<34x32xbf16>, vector<32x96xbf16>, vector<34x96xf32> -> vector<34x96xf32>
    %c27 = arith.constant 27 : index
    %c0_51 = arith.constant 0 : index
    %159 = vector.load %arg2[%c27, %c0_51] : memref<108x128xf32, #tpu.memory_space<vmem>>, vector<1x96xf32>
    %160 = vector.broadcast %159 : vector<1x96xf32> to vector<34x96xf32>
    %161 = arith.addf %158, %160 : vector<34x96xf32>
    %162 = vector.extract_strided_slice %161 {offsets = [0, 0], sizes = [34, 32], strides = [1, 1]} : vector<34x96xf32> to vector<34x32xf32>
    %163 = vector.extract_strided_slice %161 {offsets = [0, 32], sizes = [34, 32], strides = [1, 1]} : vector<34x96xf32> to vector<34x32xf32>
    %164 = vector.extract_strided_slice %161 {offsets = [0, 64], sizes = [34, 32], strides = [1, 1]} : vector<34x96xf32> to vector<34x32xf32>
    %165 = vector.extract_strided_slice %162 {offsets = [0, 0], sizes = [34, 16], strides = [1, 1]} : vector<34x32xf32> to vector<34x16xf32>
    %166 = vector.extract_strided_slice %162 {offsets = [0, 16], sizes = [34, 16], strides = [1, 1]} : vector<34x32xf32> to vector<34x16xf32>
    %167 = tpu.concatenate %165, %166 in 0 : vector<34x16xf32>, vector<34x16xf32> -> vector<68x16xf32>
    %168 = arith.truncf %167 : vector<68x16xf32> to vector<68x16xbf16>
    %169 = vector.extract_strided_slice %163 {offsets = [0, 0], sizes = [34, 16], strides = [1, 1]} : vector<34x32xf32> to vector<34x16xf32>
    %170 = vector.extract_strided_slice %163 {offsets = [0, 16], sizes = [34, 16], strides = [1, 1]} : vector<34x32xf32> to vector<34x16xf32>
    %171 = tpu.concatenate %169, %170 in 0 : vector<34x16xf32>, vector<34x16xf32> -> vector<68x16xf32>
    %172 = arith.truncf %171 : vector<68x16xf32> to vector<68x16xbf16>
    %173 = vector.extract_strided_slice %164 {offsets = [0, 0], sizes = [34, 16], strides = [1, 1]} : vector<34x32xf32> to vector<34x16xf32>
    %174 = vector.extract_strided_slice %164 {offsets = [0, 16], sizes = [34, 16], strides = [1, 1]} : vector<34x32xf32> to vector<34x16xf32>
    %175 = tpu.concatenate %173, %174 in 0 : vector<34x16xf32>, vector<34x16xf32> -> vector<68x16xf32>
    %176 = arith.truncf %175 : vector<68x16xf32> to vector<68x16xbf16>
    %cst_52 = arith.constant dense<0.000000e+00> : vector<68x68xf32>
    %177 = tpu.matmul %168, %172, %cst_52 {dimension_numbers = #tpu.dot_dimension_numbers<[1], [1], [0], [0], [0, 0, 1, 0], [], []>} : vector<68x16xbf16>, vector<68x16xbf16>, vector<68x68xf32> -> vector<68x68xf32>
    %cst_53 = arith.constant 2.500000e-01 : f32
    %178 = vector.broadcast %cst_53 : f32 to vector<68x68xf32>
    %179 = arith.mulf %177, %178 : vector<68x68xf32>
    %180 = arith.addf %179, %10 : vector<68x68xf32>
    %cst_54 = arith.constant dense<0xFF800000> : vector<68xf32>
    %181 = vector.multi_reduction <maximumf>, %180, %cst_54 [1] : vector<68x68xf32> to vector<68xf32>
    %182 = vector.shape_cast %181 : vector<68xf32> to vector<68x1xf32>
    %183 = vector.broadcast %182 : vector<68x1xf32> to vector<68x68xf32>
    %184 = arith.subf %180, %183 : vector<68x68xf32>
    %185 = math.exp %184 : vector<68x68xf32>
    %cst_55 = arith.constant dense<0.000000e+00> : vector<68xf32>
    %186 = vector.multi_reduction <add>, %185, %cst_55 [1] : vector<68x68xf32> to vector<68xf32>
    %187 = vector.shape_cast %186 : vector<68xf32> to vector<68x1xf32>
    %188 = tpu.reciprocal %187 {approx = true} : vector<68x1xf32> -> vector<68x1xf32>
    %189 = vector.broadcast %188 : vector<68x1xf32> to vector<68x68xf32>
    %190 = arith.mulf %185, %189 : vector<68x68xf32>
    %191 = arith.truncf %190 : vector<68x68xf32> to vector<68x68xbf16>
    %cst_56 = arith.constant dense<0.000000e+00> : vector<68x16xf32>
    %192 = tpu.matmul %191, %176, %cst_56 {dimension_numbers = #tpu.dot_dimension_numbers<[1], [0], [0], [1], [0, 0, 1, 1], [], []>} : vector<68x68xbf16>, vector<68x16xbf16>, vector<68x16xf32> -> vector<68x16xf32>
    %193 = vector.extract_strided_slice %192 {offsets = [0, 0], sizes = [34, 16], strides = [1, 1]} : vector<68x16xf32> to vector<34x16xf32>
    %194 = vector.extract_strided_slice %192 {offsets = [34, 0], sizes = [34, 16], strides = [1, 1]} : vector<68x16xf32> to vector<34x16xf32>
    %195 = tpu.concatenate %193, %194 in 1 : vector<34x16xf32>, vector<34x16xf32> -> vector<34x32xf32>
    %c304 = arith.constant 304 : index
    %c0_57 = arith.constant 0 : index
    %196 = vector.load %arg1[%c304, %c0_57] : memref<528x128xbf16, #tpu.memory_space<vmem>>, vector<32x32xbf16>
    %197 = arith.truncf %195 : vector<34x32xf32> to vector<34x32xbf16>
    %cst_58 = arith.constant dense<0.000000e+00> : vector<34x32xf32>
    %198 = tpu.matmul %197, %196, %cst_58 {dimension_numbers = #tpu.dot_dimension_numbers<[1], [0], [0], [1], [0, 0, 1, 1], [], []>} : vector<34x32xbf16>, vector<32x32xbf16>, vector<34x32xf32> -> vector<34x32xf32>
    %c28 = arith.constant 28 : index
    %c0_59 = arith.constant 0 : index
    %199 = vector.load %arg2[%c28, %c0_59] : memref<108x128xf32, #tpu.memory_space<vmem>>, vector<1x32xf32>
    %200 = vector.broadcast %199 : vector<1x32xf32> to vector<34x32xf32>
    %201 = arith.addf %198, %200 : vector<34x32xf32>
    %202 = arith.addf %131, %201 : vector<34x32xf32>
    %c29 = arith.constant 29 : index
    %c0_60 = arith.constant 0 : index
    %203 = vector.load %arg2[%c29, %c0_60] : memref<108x128xf32, #tpu.memory_space<vmem>>, vector<1x32xf32>
    %c30 = arith.constant 30 : index
    %c0_61 = arith.constant 0 : index
    %204 = vector.load %arg2[%c30, %c0_61] : memref<108x128xf32, #tpu.memory_space<vmem>>, vector<1x32xf32>
    %cst_62 = arith.constant dense<0.000000e+00> : vector<34xf32>
    %205 = vector.multi_reduction <add>, %202, %cst_62 [1] : vector<34x32xf32> to vector<34xf32>
    %206 = vector.shape_cast %205 : vector<34xf32> to vector<34x1xf32>
    %cst_63 = arith.constant 3.200000e+01 : f32
    %207 = vector.broadcast %cst_63 : f32 to vector<34x1xf32>
    %208 = arith.divf %206, %207 : vector<34x1xf32>
    %209 = vector.broadcast %208 : vector<34x1xf32> to vector<34x32xf32>
    %210 = arith.subf %202, %209 : vector<34x32xf32>
    %211 = arith.mulf %210, %210 : vector<34x32xf32>
    %cst_64 = arith.constant dense<0.000000e+00> : vector<34xf32>
    %212 = vector.multi_reduction <add>, %211, %cst_64 [1] : vector<34x32xf32> to vector<34xf32>
    %213 = vector.shape_cast %212 : vector<34xf32> to vector<34x1xf32>
    %cst_65 = arith.constant 3.200000e+01 : f32
    %214 = vector.broadcast %cst_65 : f32 to vector<34x1xf32>
    %215 = arith.divf %213, %214 : vector<34x1xf32>
    %216 = vector.broadcast %208 : vector<34x1xf32> to vector<34x32xf32>
    %217 = arith.subf %202, %216 : vector<34x32xf32>
    %cst_66 = arith.constant 9.99999997E-7 : f32
    %218 = vector.broadcast %cst_66 : f32 to vector<34x1xf32>
    %219 = arith.addf %215, %218 : vector<34x1xf32>
    %220 = math.rsqrt %219 : vector<34x1xf32>
    %221 = vector.broadcast %220 : vector<34x1xf32> to vector<34x32xf32>
    %222 = arith.mulf %217, %221 : vector<34x32xf32>
    %223 = vector.broadcast %203 : vector<1x32xf32> to vector<34x32xf32>
    %224 = arith.mulf %222, %223 : vector<34x32xf32>
    %225 = vector.broadcast %204 : vector<1x32xf32> to vector<34x32xf32>
    %226 = arith.addf %224, %225 : vector<34x32xf32>
    %c336 = arith.constant 336 : index
    %c0_67 = arith.constant 0 : index
    %227 = vector.load %arg1[%c336, %c0_67] : memref<528x128xbf16, #tpu.memory_space<vmem>>, vector<32x128xbf16>
    %228 = arith.truncf %226 : vector<34x32xf32> to vector<34x32xbf16>
    %cst_68 = arith.constant dense<0.000000e+00> : vector<34x128xf32>
    %229 = tpu.matmul %228, %227, %cst_68 {dimension_numbers = #tpu.dot_dimension_numbers<[1], [0], [0], [1], [0, 0, 1, 1], [], []>} : vector<34x32xbf16>, vector<32x128xbf16>, vector<34x128xf32> -> vector<34x128xf32>
    %c31 = arith.constant 31 : index
    %c0_69 = arith.constant 0 : index
    %230 = vector.load %arg2[%c31, %c0_69] : memref<108x128xf32, #tpu.memory_space<vmem>>, vector<1x128xf32>
    %231 = vector.broadcast %230 : vector<1x128xf32> to vector<34x128xf32>
    %232 = arith.addf %229, %231 : vector<34x128xf32>
    %233 = arith.mulf %232, %232 : vector<34x128xf32>
    %234 = arith.mulf %232, %233 : vector<34x128xf32>
    %cst_70 = arith.constant 4.471500e-02 : f32
    %235 = vector.broadcast %cst_70 : f32 to vector<34x128xf32>
    %236 = arith.mulf %235, %234 : vector<34x128xf32>
    %237 = arith.addf %232, %236 : vector<34x128xf32>
    %cst_71 = arith.constant 0.797884583 : f32
    %238 = vector.broadcast %cst_71 : f32 to vector<34x128xf32>
    %239 = arith.mulf %238, %237 : vector<34x128xf32>
    %240 = math.tanh %239 : vector<34x128xf32>
    %cst_72 = arith.constant 1.000000e+00 : f32
    %241 = vector.broadcast %cst_72 : f32 to vector<34x128xf32>
    %242 = arith.addf %241, %240 : vector<34x128xf32>
    %cst_73 = arith.constant 5.000000e-01 : f32
    %243 = vector.broadcast %cst_73 : f32 to vector<34x128xf32>
    %244 = arith.mulf %243, %242 : vector<34x128xf32>
    %245 = arith.mulf %232, %244 : vector<34x128xf32>
    %c368 = arith.constant 368 : index
    %c0_74 = arith.constant 0 : index
    %246 = vector.load %arg1[%c368, %c0_74] : memref<528x128xbf16, #tpu.memory_space<vmem>>, vector<128x32xbf16>
    %247 = arith.truncf %245 : vector<34x128xf32> to vector<34x128xbf16>
    %cst_75 = arith.constant dense<0.000000e+00> : vector<34x32xf32>
    %248 = tpu.matmul %247, %246, %cst_75 {dimension_numbers = #tpu.dot_dimension_numbers<[1], [0], [0], [1], [0, 0, 1, 1], [], []>} : vector<34x128xbf16>, vector<128x32xbf16>, vector<34x32xf32> -> vector<34x32xf32>
    %249 = arith.addf %202, %248 : vector<34x32xf32>
    %c32 = arith.constant 32 : index
    %c0_76 = arith.constant 0 : index
    %250 = vector.load %arg2[%c32, %c0_76] : memref<108x128xf32, #tpu.memory_space<vmem>>, vector<1x32xf32>
    %251 = vector.broadcast %250 : vector<1x32xf32> to vector<34x32xf32>
    %252 = arith.addf %249, %251 : vector<34x32xf32>
    %253 = vector.extract_strided_slice %252 {offsets = [0, 0], sizes = [2, 32], strides = [1, 1]} : vector<34x32xf32> to vector<2x32xf32>
    %c33 = arith.constant 33 : index
    %c0_77 = arith.constant 0 : index
    %254 = vector.load %arg2[%c33, %c0_77] : memref<108x128xf32, #tpu.memory_space<vmem>>, vector<1x32xf32>
    %c34 = arith.constant 34 : index
    %c0_78 = arith.constant 0 : index
    %255 = vector.load %arg2[%c34, %c0_78] : memref<108x128xf32, #tpu.memory_space<vmem>>, vector<1x32xf32>
    %cst_79 = arith.constant dense<0.000000e+00> : vector<2xf32>
    %256 = vector.multi_reduction <add>, %253, %cst_79 [1] : vector<2x32xf32> to vector<2xf32>
    %257 = vector.shape_cast %256 : vector<2xf32> to vector<2x1xf32>
    %cst_80 = arith.constant 3.200000e+01 : f32
    %258 = vector.broadcast %cst_80 : f32 to vector<2x1xf32>
    %259 = arith.divf %257, %258 : vector<2x1xf32>
    %260 = vector.broadcast %259 : vector<2x1xf32> to vector<2x32xf32>
    %261 = arith.subf %253, %260 : vector<2x32xf32>
    %262 = arith.mulf %261, %261 : vector<2x32xf32>
    %cst_81 = arith.constant dense<0.000000e+00> : vector<2xf32>
    %263 = vector.multi_reduction <add>, %262, %cst_81 [1] : vector<2x32xf32> to vector<2xf32>
    %264 = vector.shape_cast %263 : vector<2xf32> to vector<2x1xf32>
    %cst_82 = arith.constant 3.200000e+01 : f32
    %265 = vector.broadcast %cst_82 : f32 to vector<2x1xf32>
    %266 = arith.divf %264, %265 : vector<2x1xf32>
    %267 = vector.broadcast %259 : vector<2x1xf32> to vector<2x32xf32>
    %268 = arith.subf %253, %267 : vector<2x32xf32>
    %cst_83 = arith.constant 9.99999997E-7 : f32
    %269 = vector.broadcast %cst_83 : f32 to vector<2x1xf32>
    %270 = arith.addf %266, %269 : vector<2x1xf32>
    %271 = math.rsqrt %270 : vector<2x1xf32>
    %272 = vector.broadcast %271 : vector<2x1xf32> to vector<2x32xf32>
    %273 = arith.mulf %268, %272 : vector<2x32xf32>
    %274 = vector.broadcast %254 : vector<1x32xf32> to vector<2x32xf32>
    %275 = arith.mulf %273, %274 : vector<2x32xf32>
    %276 = vector.broadcast %255 : vector<1x32xf32> to vector<2x32xf32>
    %277 = arith.addf %275, %276 : vector<2x32xf32>
    %c496 = arith.constant 496 : index
    %c0_84 = arith.constant 0 : index
    %278 = vector.load %arg1[%c496, %c0_84] : memref<528x128xbf16, #tpu.memory_space<vmem>>, vector<32x128xbf16>
    %279 = arith.truncf %277 : vector<2x32xf32> to vector<2x32xbf16>
    %cst_85 = arith.constant dense<0.000000e+00> : vector<2x128xf32>
    %280 = tpu.matmul %279, %278, %cst_85 {dimension_numbers = #tpu.dot_dimension_numbers<[1], [0], [0], [1], [0, 0, 1, 1], [], []>} : vector<2x32xbf16>, vector<32x128xbf16>, vector<2x128xf32> -> vector<2x128xf32>
    %c35 = arith.constant 35 : index
    %c0_86 = arith.constant 0 : index
    %281 = vector.load %arg2[%c35, %c0_86] : memref<108x128xf32, #tpu.memory_space<vmem>>, vector<1x128xf32>
    %282 = vector.broadcast %281 : vector<1x128xf32> to vector<2x128xf32>
    %283 = arith.addf %280, %282 : vector<2x128xf32>
    %c0_87 = arith.constant 0 : index
    %c0_88 = arith.constant 0 : index
    %284 = vector.load %arg3[%c0_87, %c0_88] : memref<2x128xf32, #tpu.memory_space<vmem>>, vector<2x128xf32>
    tpu.vector_store %arg3[%c0_87, %c0_88], %283 {strides = array<i32>} : memref<2x128xf32, #tpu.memory_space<vmem>>, vector<2x128xf32>,
    return
  }
}

</mosaic_0001>

<llo_original>
// kernel: _vit_forward.1
$region0: #{_vit_forward.1}
  #allocation0 [shape = 'u32[]', space=smem, size = 0x4, offset = 0x4, fixed_abs, tag = 'smem constant byte address 0x4 - core index']
  #allocation1 [shape = 'u32[144,128]{1,0:T(1,128)}', space=vmem, size = 0x12000, scoped, tag = 'internal scratch']
  %s0 = inlined_call_operand.vmem [shape: bf16[32,48], index: 0, kind: input, shape index: {}]
  %s1 = inlined_call_operand.vmem [shape: bf16[528,128], index: 1, kind: input, shape index: {}]
  %s2 = inlined_call_operand.vmem [shape: f32[108,128], index: 2, kind: input, shape index: {}]
  %s3 = inlined_call_operand.hbm [shape: f32[2,128], index: 3, kind: output, shape index: {}]
  %s4 = sld [smem:[#allocation0]]
  $region22: #{_vit_forward.1} parent=0
    _
  %s6 = ssub.s32 1, %s4
  %s7 = scalar_select 0, %s6, %s4
  $region1: #{_vit_forward.1} parent=0
    #allocation2 [shape = 'u8[1024]{0}', space=vmem, size = 0x400, scoped, tag = 'output window, operand 0, single buffered']
    #allocation3 [shape = 's32[1]{0}', space=sflag, size = 0x4, scoped, tag = 'scoped memory for _vit_forward.1']
    %8 = vsyncpa [#allocation3], 0
    // Predicated region
    $region2: #{_vit_forward.1} parent=1 // pred_check
      _
    $region3: #{_vit_forward.1} parent=1 // pred_check_branch
      %10 = sbr.rel (0) target = $region5
    $region4: #{_vit_forward.1} parent=1 // pred_region
      _
    $region5: #{_vit_forward.1} parent=1 // pred_fallthru
      _
    // Predicated region
    $region6: #{_vit_forward.1} parent=1 // pred_check
      _
    $region7: #{_vit_forward.1} parent=1 // pred_check_branch
      %12 = sbr.rel (0) target = $region9
    $region8: #{_vit_forward.1} parent=1 // pred_region
      _
    $region9: #{_vit_forward.1} parent=1 // pred_fallthru
      _
    // Predicated region
    $region10: #{_vit_forward.1} parent=1 // pred_check
      _
    $region11: #{_vit_forward.1} parent=1 // pred_check_branch
      %14 = sbr.rel (0) target = $region13
    $region12: #{_vit_forward.1} parent=1 // pred_region
      _
    $region13: #{_vit_forward.1} parent=1 // pred_fallthru
      _
    %v16 = vld [vmem:[%s0] sm:$0xf]
    %v17 = vld [vmem:[%s0 + $0x4] sm:$0xf]
    %v18 = vld [vmem:[%s0 + $0x8] sm:$0xf]
    %v19 = vld [vmem:[%s0 + $0xc] sm:$0xf]
    %v20 = vld [vmem:[%s1] sm:$0xf]
    %v21 = vld [vmem:[%s1 + $0x4] sm:$0xf]
    %v22 = vld [vmem:[%s1 + $0x8] sm:$0xf]
    %v23 = vld [vmem:[%s1 + $0xc] sm:$0xf]
    %v24 = vld [vmem:[%s1 + $0x10] sm:$0xf]
    %v25 = vld [vmem:[%s1 + $0x14] sm:$0xf]
    %v26 = vld [vmem:[%s2] sm:$0x1]
    %v27 = vld [vmem:[%s2 + $0x1] sm:$0xff]
    %v28 = vld [vmem:[%s2 + $0x9] sm:$0xff]
    %v29 = vlaneseq
    %v30 = vshrl.u32 %v29, 7
    %v31 = vsub.s32 0, %v30
    %v32 = vrot.slane %v26, %v31
    %v37 = vunpack.c.l.b16 %v16
    %v38 = vunpack.c.l.b16 %v17
    %v39 = vunpack.c.l.b16 %v18
    %v40 = vunpack.c.l.b16 %v19
    %v41 = vpack.c.b16 %v38, %v37
    %v42 = vpack.c.b16 %v40, %v39
    %v49 = vunpack.c.l.b16 %v20
    %v50 = vunpack.c.l.b16 %v21
    %v51 = vunpack.c.l.b16 %v22
    %v52 = vunpack.c.l.b16 %v23
    %v53 = vunpack.c.l.b16 %v24
    %v54 = vunpack.c.l.b16 %v25
    %v55 = vpack.c.b16 %v50, %v49
    %v56 = vpack.c.b16 %v52, %v51
    %v57 = vpack.c.b16 %v54, %v53
    %vm61 = vcmask 392192
    %v63 = vsel %vm61, %v41, 0
    %v66 = vsel %vm61, %v42, 0
    %68 = vmatprep.subr.bf16.mxu0 0
    %69 = vmatpush1.bf16.msra.mxu0 0
    %70 = vmatprep.subr.bf16.mxu0 0
    %71 = vmatpush1.bf16.msra.mxu0 0
    %72 = vmatprep.subr.bf16.mxu0 0
    %73 = vmatpush1.bf16.msra.mxu0 0
    %74 = vmatprep.subr.bf16.mxu0 0
    %75 = vmatpush1.bf16.msra.mxu0 0
    %76 = vmatprep.subr.bf16.mxu0 0
    %77 = vmatpush1.bf16.msra.mxu0 0
    %78 = vmatprep.subr.bf16.mxu0 0
    %79 = vmatpush1.bf16.msra.mxu0 %v57
    %80 = vmatprep.subr.bf16.mxu0 0
    %81 = vmatpush1.bf16.msra.mxu0 %v56
    %82 = vmatprep.subr.bf16.mxu0 0
    %83 = vmatpush1.bf16.msra.mxu0 %v55
    %84 = vmatprep.subr.bf16.mxu0 0
    %85 = vmatpush2.bf16.msra.mxu0 0
    %86 = vmatprep.subr.bf16.mxu0 0
    %87 = vmatpush2.bf16.msra.mxu0 0
    %88 = vmatprep.subr.bf16.mxu0 0
    %89 = vmatpush2.bf16.msra.mxu0 0
    %90 = vmatprep.subr.bf16.mxu0 0
    %91 = vmatpush2.bf16.msra.mxu0 0
    %92 = vmatprep.subr.bf16.mxu0 0
    %93 = vmatpush2.bf16.msra.mxu0 0
    %94 = vmatprep.subr.bf16.mxu0 0
    %95 = vmatpush2.bf16.msra.mxu0 0
    %96 = vmatprep.subr.bf16.mxu0 0
    %97 = vmatpush2.bf16.msra.mxu0 0
    %98 = vmatprep.subr.bf16.mxu0 0
    %99 = vmatpush2.bf16.msra.mxu0 0
    %100 = vmatprep.mubr.bf16.mxu0 0
    %101 = vmatmul.mubr.bf16.gmra.mxu0 %v63
    %v102 = vpop.f32.mrf.mxu0
    %v103 = vadd.f32 %v27, %v102
    %v104 = vpop.f32.mrf.mxu0
    %v105 = vpop.f32.mrf.mxu0
    %v106 = vadd.f32 %v28, %v105
    %v107 = vpop.f32.mrf.mxu0
    %108 = vmatprep.mubr.bf16.mxu0 0
    %109 = vmatmul.mubr.bf16.gmra.mxu0 %v66
    %v110 = vpop.f32.mrf.mxu0
    %v111 = vadd.f32 %v27, %v110
    %v112 = vpop.f32.mrf.mxu0
    %v113 = vpop.f32.mrf.mxu0
    %v114 = vadd.f32 %v28, %v113
    %v115 = vpop.f32.mrf.mxu0
    %116 = vdwg.mxu0
    %vm121 = vcmask 1041408
    %v122 = vrot.slane %v103, 6
    %v123 = vrot.slane %v106, 6
    %v124 = vsel %vm121, %v122, %v123
    %v125 = vrot.slane %v111, 6
    %v126 = vsel %vm121, %v123, %v125
    %v127 = vrot.slane %v114, 6
    %v128 = vsel %vm121, %v125, %v127
    %v134 = vsel %vm121, %v32, %v122
    %v135 = vld [vmem:[%s2 + $0x28] sm:$0xff]
    %v136 = vld [vmem:[%s2 + $0x30] sm:$0xff]
    %v137 = vld [vmem:[%s2 + $0x38] sm:$0xff]
    %v138 = vld [vmem:[%s2 + $0x40] sm:$0xff]
    %v139 = vld [vmem:[%s2 + $0x48] sm:$0xff]
    %v140 = vld [vmem:[%s2 + $0x50] sm:$0xff]
    %v141 = vld [vmem:[%s2 + $0x58] sm:$0xff]
    %v142 = vld [vmem:[%s2 + $0x60] sm:$0xff]
    %v143 = vld [vmem:[%s2 + $0x68] sm:$0xf]
    %v144 = vld [vmem:[%s2 + $0x11] sm:$0x1]
    %v145 = vld [vmem:[%s2 + $0x12] sm:$0x1]
    %vm146 = vcmask 261120
    %v147 = vsel %vm146, %v134, 0.0
    %148 = vadd.xlane.f32.xlu0 %v147
    %v149 = vpop.xlane.xlu0 %148
    %v150 = vsel %vm146, %v124, 0.0
    %151 = vadd.xlane.f32.xlu0 %v150
    %v152 = vpop.xlane.xlu0 %151
    %v153 = vsel %vm146, %v126, 0.0
    %154 = vadd.xlane.f32.xlu0 %v153
    %v155 = vpop.xlane.xlu0 %154
    %v156 = vsel %vm146, %v128, 0.0
    %157 = vadd.xlane.f32.xlu0 %v156
    %v158 = vpop.xlane.xlu0 %157
    %vm159 = vcmask 254976
    %v160 = vsel %vm159, %v127, 0.0
    %161 = vadd.xlane.f32.xlu0 %v160
    %v162 = vpop.xlane.xlu0 %161
    %v163 = vrcp.pop 32.0
    %v164 = vmul.f32 %v149, %v163
    %v165 = vmul.f32 %v152, %v163
    %v166 = vmul.f32 %v155, %v163
    %v167 = vmul.f32 %v158, %v163
    %v168 = vmul.f32 %v162, %v163
    %v169 = vsub.f32 %v134, %v164
    %v170 = vsub.f32 %v124, %v165
    %v171 = vsub.f32 %v126, %v166
    %v172 = vsub.f32 %v128, %v167
    %v173 = vsub.f32 %v127, %v168
    %v174 = vmul.f32 %v169, %v169
    %v175 = vmul.f32 %v170, %v170
    %v176 = vmul.f32 %v171, %v171
    %v177 = vmul.f32 %v172, %v172
    %v178 = vmul.f32 %v173, %v173
    %v179 = vsel %vm146, %v174, 0.0
    %180 = vadd.xlane.f32.xlu0 %v179
    %v181 = vpop.xlane.xlu0 %180
    %v182 = vsel %vm146, %v175, 0.0
    %183 = vadd.xlane.f32.xlu0 %v182
    %v184 = vpop.xlane.xlu0 %183
    %v185 = vsel %vm146, %v176, 0.0
    %186 = vadd.xlane.f32.xlu0 %v185
    %v187 = vpop.xlane.xlu0 %186
    %v188 = vsel %vm146, %v177, 0.0
    %189 = vadd.xlane.f32.xlu0 %v188
    %v190 = vpop.xlane.xlu0 %189
    %v191 = vsel %vm159, %v178, 0.0
    %192 = vadd.xlane.f32.xlu0 %v191
    %v193 = vpop.xlane.xlu0 %192
    %v194 = vmul.f32 %v181, %v163
    %v195 = vmul.f32 %v184, %v163
    %v196 = vmul.f32 %v187, %v163
    %v197 = vmul.f32 %v190, %v163
    %v198 = vmul.f32 %v193, %v163
    %v199 = vadd.f32 %v194, 1e-06
    %v200 = vadd.f32 %v195, 1e-06
    %v201 = vadd.f32 %v196, 1e-06
    %v202 = vadd.f32 %v197, 1e-06
    %v203 = vadd.f32 %v198, 1e-06
    %v204 = vrsqrt.pop %v199
    %v205 = vrsqrt.pop %v200
    %v206 = vrsqrt.pop %v201
    %v207 = vrsqrt.pop %v202
    %v208 = vrsqrt.pop %v203
    %v209 = vmul.f32 %v169, %v204
    %v210 = vmul.f32 %v170, %v205
    %v211 = vmul.f32 %v171, %v206
    %v212 = vmul.f32 %v172, %v207
    %v213 = vmul.f32 %v173, %v208
    %v214 = vlaneseq
    %v215 = vshrl.u32 %v214, 7
    %v216 = vsub.s32 0, %v215
    %v217 = vrot.slane %v144, %v216
    %v218 = vmul.f32 %v209, %v217
    %v219 = vmul.f32 %v210, %v217
    %v220 = vmul.f32 %v211, %v217
    %v221 = vmul.f32 %v212, %v217
    %v222 = vmul.f32 %v213, %v217
    %v223 = vlaneseq
    %v224 = vshrl.u32 %v223, 7
    %v225 = vsub.s32 0, %v224
    %v226 = vrot.slane %v145, %v225
    %v227 = vadd.f32 %v218, %v226
    %v228 = vadd.f32 %v219, %v226
    %v229 = vadd.f32 %v220, %v226
    %v230 = vadd.f32 %v221, %v226
    %v231 = vadd.f32 %v222, %v226
    %v232 = vld [vmem:[%s1 + $0x18] sm:$0xf]
    %v233 = vld [vmem:[%s1 + $0x1c] sm:$0xf]
    %v234 = vld [vmem:[%s1 + $0x20] sm:$0xf]
    %v235 = vld [vmem:[%s1 + $0x24] sm:$0xf]
    %v236 = vpack.c.bf16 %v228, %v227
    %v237 = vpack.c.bf16 %v230, %v229
    %v238 = vpack.c.bf16 %v231, %v231
    %v239 = vld [vmem:[%s2 + $0x13] sm:$0x1]
    %v240 = vlaneseq
    %v241 = vshrl.u32 %v240, 7
    %v242 = vsub.s32 0, %v241
    %v243 = vrot.slane %v239, %v242
    %v248 = vunpack.c.l.b16 %v232
    %v249 = vunpack.c.l.b16 %v233
    %v250 = vunpack.c.l.b16 %v234
    %v251 = vunpack.c.l.b16 %v235
    %v252 = vpack.c.b16 %v249, %v248
    %v253 = vpack.c.b16 %v251, %v250
    %v257 = vsel %vm146, %v236, 0
    %v260 = vsel %vm146, %v237, 0
    %v263 = vsel %vm146, %v238, 0
    %265 = vmatprep.subr.bf16.mxu0 0
    %266 = vmatpush1.bf16.msra.mxu0 0
    %267 = vmatprep.subr.bf16.mxu0 0
    %268 = vmatpush1.bf16.msra.mxu0 0
    %269 = vmatprep.subr.bf16.mxu0 0
    %270 = vmatpush1.bf16.msra.mxu0 0
    %271 = vmatprep.subr.bf16.mxu0 0
    %272 = vmatpush1.bf16.msra.mxu0 0
    %273 = vmatprep.subr.bf16.mxu0 0
    %274 = vmatpush1.bf16.msra.mxu0 0
    %275 = vmatprep.subr.bf16.mxu0 0
    %276 = vmatpush1.bf16.msra.mxu0 0
    %277 = vmatprep.subr.bf16.mxu0 0
    %278 = vmatpush1.bf16.msra.mxu0 %v253
    %279 = vmatprep.subr.bf16.mxu0 0
    %280 = vmatpush1.bf16.msra.mxu0 %v252
    %281 = vmatprep.subr.bf16.mxu0 0
    %282 = vmatpush2.bf16.msra.mxu0 0
    %283 = vmatprep.subr.bf16.mxu0 0
    %284 = vmatpush2.bf16.msra.mxu0 0
    %285 = vmatprep.subr.bf16.mxu0 0
    %286 = vmatpush2.bf16.msra.mxu0 0
    %287 = vmatprep.subr.bf16.mxu0 0
    %288 = vmatpush2.bf16.msra.mxu0 0
    %289 = vmatprep.subr.bf16.mxu0 0
    %290 = vmatpush2.bf16.msra.mxu0 0
    %291 = vmatprep.subr.bf16.mxu0 0
    %292 = vmatpush2.bf16.msra.mxu0 0
    %293 = vmatprep.subr.bf16.mxu0 0
    %294 = vmatpush2.bf16.msra.mxu0 0
    %295 = vmatprep.subr.bf16.mxu0 0
    %296 = vmatpush2.bf16.msra.mxu0 0
    %297 = vmatprep.mubr.bf16.mxu0 0
    %298 = vmatmul.mubr.bf16.gmra.mxu0 %v257
    %v299 = vpop.f32.mrf.mxu0
    %v300 = vadd.f32 %v243, %v299
    %v301 = vpop.f32.mrf.mxu0
    %v302 = vpop.f32.mrf.mxu0
    %v303 = vadd.f32 %v243, %v302
    %v304 = vpop.f32.mrf.mxu0
    %305 = vmatprep.mubr.bf16.mxu0 0
    %306 = vmatmul.mubr.bf16.gmra.mxu0 %v260
    %v307 = vpop.f32.mrf.mxu0
    %v308 = vadd.f32 %v243, %v307
    %v309 = vpop.f32.mrf.mxu0
    %v310 = vpop.f32.mrf.mxu0
    %v311 = vadd.f32 %v243, %v310
    %v312 = vpop.f32.mrf.mxu0
    %313 = vmatprep.mubr.bf16.mxu0 0
    %314 = vmatmul.mubr.bf16.gmra.mxu0 %v263
    %v315 = vpop.f32.mrf.mxu0
    %v316 = vadd.f32 %v243, %v315
    %v317 = vpop.f32.mrf.mxu0
    %v318 = vpop.f32.mrf.mxu0
    %v319 = vpop.f32.mrf.mxu0
    %320 = vdwg.mxu0
    %v326 = vrot.slane %v300, 6
    %v327 = vrot.slane %v303, 6
    %v328 = vsel %vm121, %v326, %v327
    %v329 = vrot.slane %v308, 6
    %v330 = vsel %vm121, %v327, %v329
    %v331 = vrot.slane %v311, 6
    %v332 = vsel %vm121, %v329, %v331
    %v333 = vrot.slane %v316, 6
    %v334 = vsel %vm121, %v331, %v333
    %335 = vrot.lane.b32.xlu0 %v326, 112
    %v336 = vpop.permute.xlu0 %335
    %337 = vrot.lane.b32.xlu0 %v328, 112
    %v338 = vpop.permute.xlu0 %337
    %339 = vrot.lane.b32.xlu0 %v330, 112
    %v340 = vpop.permute.xlu0 %339
    %341 = vrot.lane.b32.xlu0 %v332, 112
    %v342 = vpop.permute.xlu0 %341
    %343 = vrot.lane.b32.xlu0 %v334, 112
    %v344 = vpop.permute.xlu0 %343
    %v350 = vsel %vm121, %v316, %v336
    %v351 = vpack.c.bf16 %v303, %v300
    %v352 = vpack.c.bf16 %v311, %v308
    %v353 = vpack.c.bf16 %v338, %v350
    %v354 = vpack.c.bf16 %v342, %v340
    %v355 = vpack.c.bf16 %v344, %v344
    %361 = vrot.lane.b32.xlu0 %v351, 96
    %v362 = vpop.permute.xlu0 %361
    %363 = vrot.lane.b32.xlu0 %v352, 96
    %v364 = vpop.permute.xlu0 %363
    %365 = vrot.lane.b32.xlu0 %v353, 96
    %v366 = vpop.permute.xlu0 %365
    %367 = vrot.lane.b32.xlu0 %v354, 96
    %v368 = vpop.permute.xlu0 %367
    %369 = vrot.lane.b32.xlu0 %v355, 96
    %v370 = vpop.permute.xlu0 %369
    %vm371 = vcmask 130048
    %v373 = vsel %vm371, %v351, 0
    %v376 = vsel %vm371, %v352, 0
    %v379 = vsel %vm371, %v353, 0
    %v382 = vsel %vm371, %v354, 0
    %v385 = vsel %vm371, %v355, 0
    %v388 = vsel %vm371, %v362, 0
    %v391 = vsel %vm371, %v364, 0
    %v394 = vsel %vm371, %v366, 0
    %v397 = vsel %vm371, %v368, 0
    %v400 = vsel %vm371, %v370, 0
    %402 = vmatprep.subr.bf16.mxu0 0
    %403 = vmatpush1.bf16.xpose.msra.mxu0 0
    %404 = vmatprep.subr.bf16.mxu0 0
    %405 = vmatpush1.bf16.xpose.msra.mxu0 0
    %406 = vmatprep.subr.bf16.mxu0 0
    %407 = vmatpush1.bf16.xpose.msra.mxu0 0
    %408 = vmatprep.subr.bf16.mxu0 0
    %409 = vmatpush1.bf16.xpose.msra.mxu0 %v400
    %410 = vmatprep.subr.bf16.mxu0 0
    %411 = vmatpush1.bf16.xpose.msra.mxu0 %v397
    %412 = vmatprep.subr.bf16.mxu0 0
    %413 = vmatpush1.bf16.xpose.msra.mxu0 %v394
    %414 = vmatprep.subr.bf16.mxu0 0
    %415 = vmatpush1.bf16.xpose.msra.mxu0 %v391
    %416 = vmatprep.subr.bf16.mxu0 0
    %417 = vmatpush1.bf16.xpose.msra.mxu0 %v388
    %418 = vmatprep.subr.bf16.mxu0 0
    %419 = vmatpush2.bf16.xpose.msra.mxu0 0
    %420 = vmatprep.subr.bf16.mxu0 0
    %421 = vmatpush2.bf16.xpose.msra.mxu0 0
    %422 = vmatprep.subr.bf16.mxu0 0
    %423 = vmatpush2.bf16.xpose.msra.mxu0 0
    %424 = vmatprep.subr.bf16.mxu0 0
    %425 = vmatpush2.bf16.xpose.msra.mxu0 0
    %426 = vmatprep.subr.bf16.mxu0 0
    %427 = vmatpush2.bf16.xpose.msra.mxu0 0
    %428 = vmatprep.subr.bf16.mxu0 0
    %429 = vmatpush2.bf16.xpose.msra.mxu0 0
    %430 = vmatprep.subr.bf16.mxu0 0
    %431 = vmatpush2.bf16.xpose.msra.mxu0 0
    %432 = vmatprep.subr.bf16.mxu0 0
    %433 = vmatpush2.bf16.xpose.msra.mxu0 0
    %434 = vmatprep.mubr.bf16.mxu0 0
    %435 = vmatmul.mubr.bf16.gmra.mxu0 %v373
    %v436 = vpop.f32.mrf.mxu0
    %v437 = vadd.f32 0.0, %v436
    %v438 = vpop.f32.mrf.mxu0
    %v439 = vpop.f32.mrf.mxu0
    %v440 = vadd.f32 0.0, %v439
    %v441 = vpop.f32.mrf.mxu0
    %442 = vmatprep.mubr.bf16.mxu0 0
    %443 = vmatmul.mubr.bf16.gmra.mxu0 %v376
    %v444 = vpop.f32.mrf.mxu0
    %v445 = vadd.f32 0.0, %v444
    %v446 = vpop.f32.mrf.mxu0
    %v447 = vpop.f32.mrf.mxu0
    %v448 = vadd.f32 0.0, %v447
    %v449 = vpop.f32.mrf.mxu0
    %450 = vmatprep.mubr.bf16.mxu0 0
    %451 = vmatmul.mubr.bf16.gmra.mxu0 %v379
    %v452 = vpop.f32.mrf.mxu0
    %v453 = vadd.f32 0.0, %v452
    %v454 = vpop.f32.mrf.mxu0
    %v455 = vpop.f32.mrf.mxu0
    %v456 = vadd.f32 0.0, %v455
    %v457 = vpop.f32.mrf.mxu0
    %458 = vmatprep.mubr.bf16.mxu0 0
    %459 = vmatmul.mubr.bf16.gmra.mxu0 %v382
    %v460 = vpop.f32.mrf.mxu0
    %v461 = vadd.f32 0.0, %v460
    %v462 = vpop.f32.mrf.mxu0
    %v463 = vpop.f32.mrf.mxu0
    %v464 = vadd.f32 0.0, %v463
    %v465 = vpop.f32.mrf.mxu0
    %466 = vmatprep.mubr.bf16.mxu0 0
    %467 = vmatmul.mubr.bf16.gmra.mxu0 %v385
    %v468 = vpop.f32.mrf.mxu0
    %v469 = vadd.f32 0.0, %v468
    %v470 = vpop.f32.mrf.mxu0
    %v471 = vpop.f32.mrf.mxu0
    %v472 = vpop.f32.mrf.mxu0
    %473 = vdwg.mxu0
    %v474 = vmul.f32 %v437, 0.25
    %v475 = vmul.f32 %v440, 0.25
    %v476 = vmul.f32 %v445, 0.25
    %v477 = vmul.f32 %v448, 0.25
    %v478 = vmul.f32 %v453, 0.25
    %v479 = vmul.f32 %v456, 0.25
    %v480 = vmul.f32 %v461, 0.25
    %v481 = vmul.f32 %v464, 0.25
    %v482 = vmul.f32 %v469, 0.25
    %v483 = vadd.f32 %v474, %v135
    %v484 = vadd.f32 %v475, %v136
    %v485 = vadd.f32 %v476, %v137
    %v486 = vadd.f32 %v477, %v138
    %v487 = vadd.f32 %v478, %v139
    %v488 = vadd.f32 %v479, %v140
    %v489 = vadd.f32 %v480, %v141
    %v490 = vadd.f32 %v481, %v142
    %v491 = vadd.f32 %v482, %v143
    %vm492 = vcmask 556032
    %v493 = vsel %vm492, %v483, -inf
    %494 = vmax.xlane.f32.xlu0 %v493
    %v495 = vpop.xlane.xlu0 %494
    %v496 = vsel %vm492, %v484, -inf
    %497 = vmax.xlane.f32.xlu0 %v496
    %v498 = vpop.xlane.xlu0 %497
    %v499 = vsel %vm492, %v485, -inf
    %500 = vmax.xlane.f32.xlu0 %v499
    %v501 = vpop.xlane.xlu0 %500
    %v502 = vsel %vm492, %v486, -inf
    %503 = vmax.xlane.f32.xlu0 %v502
    %v504 = vpop.xlane.xlu0 %503
    %v505 = vsel %vm492, %v487, -inf
    %506 = vmax.xlane.f32.xlu0 %v505
    %v507 = vpop.xlane.xlu0 %506
    %v508 = vsel %vm492, %v488, -inf
    %509 = vmax.xlane.f32.xlu0 %v508
    %v510 = vpop.xlane.xlu0 %509
    %v511 = vsel %vm492, %v489, -inf
    %512 = vmax.xlane.f32.xlu0 %v511
    %v513 = vpop.xlane.xlu0 %512
    %v514 = vsel %vm492, %v490, -inf
    %515 = vmax.xlane.f32.xlu0 %v514
    %v516 = vpop.xlane.xlu0 %515
    %vm517 = vcmask 551936
    %v518 = vsel %vm517, %v491, -inf
    %519 = vmax.xlane.f32.xlu0 %v518
    %v520 = vpop.xlane.xlu0 %519
    %v521 = vsub.f32 %v483, %v495
    %v522 = vsub.f32 %v484, %v498
    %v523 = vsub.f32 %v485, %v501
    %v524 = vsub.f32 %v486, %v504
    %v525 = vsub.f32 %v487, %v507
    %v526 = vsub.f32 %v488, %v510
    %v527 = vsub.f32 %v489, %v513
    %v528 = vsub.f32 %v490, %v516
    %v529 = vsub.f32 %v491, %v520
    %v530 = vmul.f32 %v521, 1.442695
    %v531 = vpow.pop %v530
    %v532 = vmul.f32 %v522, 1.442695
    %v533 = vpow.pop %v532
    %v534 = vmul.f32 %v523, 1.442695
    %v535 = vpow.pop %v534
    %v536 = vmul.f32 %v524, 1.442695
    %v537 = vpow.pop %v536
    %v538 = vmul.f32 %v525, 1.442695
    %v539 = vpow.pop %v538
    %v540 = vmul.f32 %v526, 1.442695
    %v541 = vpow.pop %v540
    %v542 = vmul.f32 %v527, 1.442695
    %v543 = vpow.pop %v542
    %v544 = vmul.f32 %v528, 1.442695
    %v545 = vpow.pop %v544
    %v546 = vmul.f32 %v529, 1.442695
    %v547 = vpow.pop %v546
    %v548 = vsel %vm492, %v531, 0.0
    %549 = vadd.xlane.f32.xlu0 %v548
    %v550 = vpop.xlane.xlu0 %549
    %v551 = vsel %vm492, %v533, 0.0
    %552 = vadd.xlane.f32.xlu0 %v551
    %v553 = vpop.xlane.xlu0 %552
    %v554 = vsel %vm492, %v535, 0.0
    %555 = vadd.xlane.f32.xlu0 %v554
    %v556 = vpop.xlane.xlu0 %555
    %v557 = vsel %vm492, %v537, 0.0
    %558 = vadd.xlane.f32.xlu0 %v557
    %v559 = vpop.xlane.xlu0 %558
    %v560 = vsel %vm492, %v539, 0.0
    %561 = vadd.xlane.f32.xlu0 %v560
    %v562 = vpop.xlane.xlu0 %561
    %v563 = vsel %vm492, %v541, 0.0
    %564 = vadd.xlane.f32.xlu0 %v563
    %v565 = vpop.xlane.xlu0 %564
    %v566 = vsel %vm492, %v543, 0.0
    %567 = vadd.xlane.f32.xlu0 %v566
    %v568 = vpop.xlane.xlu0 %567
    %v569 = vsel %vm492, %v545, 0.0
    %570 = vadd.xlane.f32.xlu0 %v569
    %v571 = vpop.xlane.xlu0 %570
    %v572 = vsel %vm517, %v547, 0.0
    %573 = vadd.xlane.f32.xlu0 %v572
    %v574 = vpop.xlane.xlu0 %573
    %v575 = vrcp.pop %v550
    %v576 = vrcp.pop %v553
    %v577 = vrcp.pop %v556
    %v578 = vrcp.pop %v559
    %v579 = vrcp.pop %v562
    %v580 = vrcp.pop %v565
    %v581 = vrcp.pop %v568
    %v582 = vrcp.pop %v571
    %v583 = vrcp.pop %v574
    %v584 = vmul.f32 %v531, %v575
    %v585 = vmul.f32 %v533, %v576
    %v586 = vmul.f32 %v535, %v577
    %v587 = vmul.f32 %v537, %v578
    %v588 = vmul.f32 %v539, %v579
    %v589 = vmul.f32 %v541, %v580
    %v590 = vmul.f32 %v543, %v581
    %v591 = vmul.f32 %v545, %v582
    %v592 = vmul.f32 %v547, %v583
    %v593 = vpack.c.bf16 %v585, %v584
    %v594 = vpack.c.bf16 %v587, %v586
    %v595 = vpack.c.bf16 %v589, %v588
    %v596 = vpack.c.bf16 %v591, %v590
    %v597 = vpack.c.bf16 %v592, %v592
    %598 = vrot.lane.b32.xlu0 %v351, 64
    %v599 = vpop.permute.xlu0 %598
    %600 = vrot.lane.b32.xlu0 %v352, 64
    %v601 = vpop.permute.xlu0 %600
    %602 = vrot.lane.b32.xlu0 %v353, 64
    %v603 = vpop.permute.xlu0 %602
    %604 = vrot.lane.b32.xlu0 %v354, 64
    %v605 = vpop.permute.xlu0 %604
    %606 = vrot.lane.b32.xlu0 %v355, 64
    %v607 = vpop.permute.xlu0 %606
    %v613 = vsel %vm492, %v593, 0
    %v616 = vsel %vm492, %v594, 0
    %v619 = vsel %vm492, %v595, 0
    %v622 = vsel %vm492, %v596, 0
    %v625 = vsel %vm492, %v597, 0
    %v628 = vsel %vm121, %v607, 0
    %630 = vmatprep.subr.bf16.mxu0 0
    %631 = vmatpush1.bf16.msra.mxu0 0
    %632 = vmatprep.subr.bf16.mxu0 0
    %633 = vmatpush1.bf16.msra.mxu0 0
    %634 = vmatprep.subr.bf16.mxu0 0
    %635 = vmatpush1.bf16.msra.mxu0 0
    %636 = vmatprep.subr.bf16.mxu0 0
    %637 = vmatpush1.bf16.msra.mxu0 %v628
    %638 = vmatprep.subr.bf16.mxu0 0
    %639 = vmatpush1.bf16.msra.mxu0 %v605
    %640 = vmatprep.subr.bf16.mxu0 0
    %641 = vmatpush1.bf16.msra.mxu0 %v603
    %642 = vmatprep.subr.bf16.mxu0 0
    %643 = vmatpush1.bf16.msra.mxu0 %v601
    %644 = vmatprep.subr.bf16.mxu0 0
    %645 = vmatpush1.bf16.msra.mxu0 %v599
    %646 = vmatprep.subr.bf16.mxu0 0
    %647 = vmatpush2.bf16.msra.mxu0 0
    %648 = vmatprep.subr.bf16.mxu0 0
    %649 = vmatpush2.bf16.msra.mxu0 0
    %650 = vmatprep.subr.bf16.mxu0 0
    %651 = vmatpush2.bf16.msra.mxu0 0
    %652 = vmatprep.subr.bf16.mxu0 0
    %653 = vmatpush2.bf16.msra.mxu0 0
    %654 = vmatprep.subr.bf16.mxu0 0
    %655 = vmatpush2.bf16.msra.mxu0 0
    %656 = vmatprep.subr.bf16.mxu0 0
    %657 = vmatpush2.bf16.msra.mxu0 0
    %658 = vmatprep.subr.bf16.mxu0 0
    %659 = vmatpush2.bf16.msra.mxu0 0
    %660 = vmatprep.subr.bf16.mxu0 0
    %661 = vmatpush2.bf16.msra.mxu0 0
    %662 = vmatprep.mubr.bf16.mxu0 0
    %663 = vmatmul.mubr.bf16.gmra.mxu0 %v613
    %v664 = vpop.f32.mrf.mxu0
    %v665 = vadd.f32 0.0, %v664
    %v666 = vpop.f32.mrf.mxu0
    %v667 = vpop.f32.mrf.mxu0
    %v668 = vadd.f32 0.0, %v667
    %v669 = vpop.f32.mrf.mxu0
    %670 = vmatprep.mubr.bf16.mxu0 0
    %671 = vmatmul.mubr.bf16.gmra.mxu0 %v616
    %v672 = vpop.f32.mrf.mxu0
    %v673 = vadd.f32 0.0, %v672
    %v674 = vpop.f32.mrf.mxu0
    %v675 = vpop.f32.mrf.mxu0
    %v676 = vadd.f32 0.0, %v675
    %v677 = vpop.f32.mrf.mxu0
    %678 = vmatprep.mubr.bf16.mxu0 0
    %679 = vmatmul.mubr.bf16.gmra.mxu0 %v619
    %v680 = vpop.f32.mrf.mxu0
    %v681 = vadd.f32 0.0, %v680
    %v682 = vpop.f32.mrf.mxu0
    %v683 = vpop.f32.mrf.mxu0
    %v684 = vadd.f32 0.0, %v683
    %v685 = vpop.f32.mrf.mxu0
    %686 = vmatprep.mubr.bf16.mxu0 0
    %687 = vmatmul.mubr.bf16.gmra.mxu0 %v622
    %v688 = vpop.f32.mrf.mxu0
    %v689 = vadd.f32 0.0, %v688
    %v690 = vpop.f32.mrf.mxu0
    %v691 = vpop.f32.mrf.mxu0
    %v692 = vadd.f32 0.0, %v691
    %v693 = vpop.f32.mrf.mxu0
    %694 = vmatprep.mubr.bf16.mxu0 0
    %695 = vmatmul.mubr.bf16.gmra.mxu0 %v625
    %v696 = vpop.f32.mrf.mxu0
    %v697 = vadd.f32 0.0, %v696
    %v698 = vpop.f32.mrf.mxu0
    %v699 = vpop.f32.mrf.mxu0
    %v700 = vpop.f32.mrf.mxu0
    %701 = vdwg.mxu0
    %vm707 = vcmask 1045504
    %v708 = vrot.slane %v681, 2
    %v709 = vrot.slane %v684, 2
    %v710 = vsel %vm707, %v708, %v709
    %v711 = vrot.slane %v689, 2
    %v712 = vsel %vm707, %v709, %v711
    %v713 = vrot.slane %v692, 2
    %v714 = vsel %vm707, %v711, %v713
    %v715 = vrot.slane %v697, 2
    %v716 = vsel %vm707, %v713, %v715
    %717 = vrot.lane.b32.xlu0 %v710, 16
    %v718 = vpop.permute.xlu0 %717
    %719 = vrot.lane.b32.xlu0 %v712, 16
    %v720 = vpop.permute.xlu0 %719
    %721 = vrot.lane.b32.xlu0 %v714, 16
    %v722 = vpop.permute.xlu0 %721
    %723 = vrot.lane.b32.xlu0 %v716, 16
    %v724 = vpop.permute.xlu0 %723
    %725 = vrot.lane.b32.xlu0 %v715, 16
    %v726 = vpop.permute.xlu0 %725
    %v732 = vsel %vm371, %v665, %v718
    %v733 = vsel %vm371, %v668, %v720
    %v734 = vsel %vm371, %v673, %v722
    %v735 = vsel %vm371, %v676, %v724
    %v736 = vsel %vm371, %v681, %v726
    %v737 = vld [vmem:[%s1 + $0x28] sm:$0xf]
    %v738 = vld [vmem:[%s1 + $0x2c] sm:$0xf]
    %v739 = vld [vmem:[%s1 + $0x30] sm:$0xf]
    %v740 = vld [vmem:[%s1 + $0x34] sm:$0xf]
    %v741 = vpack.c.bf16 %v733, %v732
    %v742 = vpack.c.bf16 %v735, %v734
    %v743 = vpack.c.bf16 %v736, %v736
    %v744 = vld [vmem:[%s2 + $0x14] sm:$0x1]
    %v745 = vlaneseq
    %v746 = vshrl.u32 %v745, 7
    %v747 = vsub.s32 0, %v746
    %v748 = vrot.slane %v744, %v747
    %v753 = vunpack.c.l.b16 %v737
    %v754 = vunpack.c.l.b16 %v738
    %v755 = vunpack.c.l.b16 %v739
    %v756 = vunpack.c.l.b16 %v740
    %v757 = vpack.c.b16 %v754, %v753
    %v758 = vpack.c.b16 %v756, %v755
    %v762 = vsel %vm146, %v741, 0
    %v765 = vsel %vm146, %v742, 0
    %v768 = vsel %vm146, %v743, 0
    %770 = vmatprep.subr.bf16.mxu0 0
    %771 = vmatpush1.bf16.msra.mxu0 0
    %772 = vmatprep.subr.bf16.mxu0 0
    %773 = vmatpush1.bf16.msra.mxu0 0
    %774 = vmatprep.subr.bf16.mxu0 0
    %775 = vmatpush1.bf16.msra.mxu0 0
    %776 = vmatprep.subr.bf16.mxu0 0
    %777 = vmatpush1.bf16.msra.mxu0 0
    %778 = vmatprep.subr.bf16.mxu0 0
    %779 = vmatpush1.bf16.msra.mxu0 0
    %780 = vmatprep.subr.bf16.mxu0 0
    %781 = vmatpush1.bf16.msra.mxu0 0
    %782 = vmatprep.subr.bf16.mxu0 0
    %783 = vmatpush1.bf16.msra.mxu0 %v758
    %784 = vmatprep.subr.bf16.mxu0 0
    %785 = vmatpush1.bf16.msra.mxu0 %v757
    %786 = vmatprep.subr.bf16.mxu0 0
    %787 = vmatpush2.bf16.msra.mxu0 0
    %788 = vmatprep.subr.bf16.mxu0 0
    %789 = vmatpush2.bf16.msra.mxu0 0
    %790 = vmatprep.subr.bf16.mxu0 0
    %791 = vmatpush2.bf16.msra.mxu0 0
    %792 = vmatprep.subr.bf16.mxu0 0
    %793 = vmatpush2.bf16.msra.mxu0 0
    %794 = vmatprep.subr.bf16.mxu0 0
    %795 = vmatpush2.bf16.msra.mxu0 0
    %796 = vmatprep.subr.bf16.mxu0 0
    %797 = vmatpush2.bf16.msra.mxu0 0
    %798 = vmatprep.subr.bf16.mxu0 0
    %799 = vmatpush2.bf16.msra.mxu0 0
    %800 = vmatprep.subr.bf16.mxu0 0
    %801 = vmatpush2.bf16.msra.mxu0 0
    %802 = vmatprep.mubr.bf16.mxu0 0
    %803 = vmatmul.mubr.bf16.gmra.mxu0 %v762
    %v804 = vpop.f32.mrf.mxu0
    %v805 = vadd.f32 %v748, %v804
    %v806 = vpop.f32.mrf.mxu0
    %v807 = vpop.f32.mrf.mxu0
    %v808 = vadd.f32 %v748, %v807
    %v809 = vpop.f32.mrf.mxu0
    %810 = vmatprep.mubr.bf16.mxu0 0
    %811 = vmatmul.mubr.bf16.gmra.mxu0 %v765
    %v812 = vpop.f32.mrf.mxu0
    %v813 = vadd.f32 %v748, %v812
    %v814 = vpop.f32.mrf.mxu0
    %v815 = vpop.f32.mrf.mxu0
    %v816 = vadd.f32 %v748, %v815
    %v817 = vpop.f32.mrf.mxu0
    %818 = vmatprep.mubr.bf16.mxu0 0
    %819 = vmatmul.mubr.bf16.gmra.mxu0 %v768
    %v820 = vpop.f32.mrf.mxu0
    %v821 = vadd.f32 %v748, %v820
    %v822 = vpop.f32.mrf.mxu0
    %v823 = vpop.f32.mrf.mxu0
    %v824 = vpop.f32.mrf.mxu0
    %825 = vdwg.mxu0
    %v826 = vadd.f32 %v134, %v805
    %v827 = vadd.f32 %v124, %v808
    %v828 = vadd.f32 %v126, %v813
    %v829 = vadd.f32 %v128, %v816
    %v830 = vadd.f32 %v127, %v821
    %v831 = vld [vmem:[%s2 + $0x15] sm:$0x1]
    %v832 = vld [vmem:[%s2 + $0x16] sm:$0x1]
    %v833 = vsel %vm146, %v826, 0.0
    %834 = vadd.xlane.f32.xlu0 %v833
    %v835 = vpop.xlane.xlu0 %834
    %v836 = vsel %vm146, %v827, 0.0
    %837 = vadd.xlane.f32.xlu0 %v836
    %v838 = vpop.xlane.xlu0 %837
    %v839 = vsel %vm146, %v828, 0.0
    %840 = vadd.xlane.f32.xlu0 %v839
    %v841 = vpop.xlane.xlu0 %840
    %v842 = vsel %vm146, %v829, 0.0
    %843 = vadd.xlane.f32.xlu0 %v842
    %v844 = vpop.xlane.xlu0 %843
    %v845 = vsel %vm159, %v830, 0.0
    %846 = vadd.xlane.f32.xlu0 %v845
    %v847 = vpop.xlane.xlu0 %846
    %v848 = vmul.f32 %v835, %v163
    %v849 = vmul.f32 %v838, %v163
    %v850 = vmul.f32 %v841, %v163
    %v851 = vmul.f32 %v844, %v163
    %v852 = vmul.f32 %v847, %v163
    %v853 = vsub.f32 %v826, %v848
    %v854 = vsub.f32 %v827, %v849
    %v855 = vsub.f32 %v828, %v850
    %v856 = vsub.f32 %v829, %v851
    %v857 = vsub.f32 %v830, %v852
    %v858 = vmul.f32 %v853, %v853
    %v859 = vmul.f32 %v854, %v854
    %v860 = vmul.f32 %v855, %v855
    %v861 = vmul.f32 %v856, %v856
    %v862 = vmul.f32 %v857, %v857
    %v863 = vsel %vm146, %v858, 0.0
    %864 = vadd.xlane.f32.xlu0 %v863
    %v865 = vpop.xlane.xlu0 %864
    %v866 = vsel %vm146, %v859, 0.0
    %867 = vadd.xlane.f32.xlu0 %v866
    %v868 = vpop.xlane.xlu0 %867
    %v869 = vsel %vm146, %v860, 0.0
    %870 = vadd.xlane.f32.xlu0 %v869
    %v871 = vpop.xlane.xlu0 %870
    %v872 = vsel %vm146, %v861, 0.0
    %873 = vadd.xlane.f32.xlu0 %v872
    %v874 = vpop.xlane.xlu0 %873
    %v875 = vsel %vm159, %v862, 0.0
    %876 = vadd.xlane.f32.xlu0 %v875
    %v877 = vpop.xlane.xlu0 %876
    %v878 = vmul.f32 %v865, %v163
    %v879 = vmul.f32 %v868, %v163
    %v880 = vmul.f32 %v871, %v163
    %v881 = vmul.f32 %v874, %v163
    %v882 = vmul.f32 %v877, %v163
    %v883 = vadd.f32 %v878, 1e-06
    %v884 = vadd.f32 %v879, 1e-06
    %v885 = vadd.f32 %v880, 1e-06
    %v886 = vadd.f32 %v881, 1e-06
    %v887 = vadd.f32 %v882, 1e-06
    %v888 = vrsqrt.pop %v883
    %v889 = vrsqrt.pop %v884
    %v890 = vrsqrt.pop %v885
    %v891 = vrsqrt.pop %v886
    %v892 = vrsqrt.pop %v887
    %v893 = vmul.f32 %v853, %v888
    %v894 = vmul.f32 %v854, %v889
    %v895 = vmul.f32 %v855, %v890
    %v896 = vmul.f32 %v856, %v891
    %v897 = vmul.f32 %v857, %v892
    %v898 = vlaneseq
    %v899 = vshrl.u32 %v898, 7
    %v900 = vsub.s32 0, %v899
    %v901 = vrot.slane %v831, %v900
    %v902 = vmul.f32 %v893, %v901
    %v903 = vmul.f32 %v894, %v901
    %v904 = vmul.f32 %v895, %v901
    %v905 = vmul.f32 %v896, %v901
    %v906 = vmul.f32 %v897, %v901
    %v907 = vlaneseq
    %v908 = vshrl.u32 %v907, 7
    %v909 = vsub.s32 0, %v908
    %v910 = vrot.slane %v832, %v909
    %v911 = vadd.f32 %v902, %v910
    %v912 = vadd.f32 %v903, %v910
    %v913 = vadd.f32 %v904, %v910
    %v914 = vadd.f32 %v905, %v910
    %v915 = vadd.f32 %v906, %v910
    %v916 = vld [vmem:[%s1 + $0x38] sm:$0xf]
    %v917 = vld [vmem:[%s1 + $0x3c] sm:$0xf]
    %v918 = vld [vmem:[%s1 + $0x40] sm:$0xf]
    %v919 = vld [vmem:[%s1 + $0x44] sm:$0xf]
    %v920 = vpack.c.bf16 %v912, %v911
    %v921 = vpack.c.bf16 %v914, %v913
    %v922 = vpack.c.bf16 %v915, %v915
    %v923 = vld [vmem:[%s2 + $0x17] sm:$0x1]
    %v924 = vlaneseq
    %v925 = vshrl.u32 %v924, 7
    %v926 = vsub.s32 0, %v925
    %v927 = vrot.slane %v923, %v926
    %v932 = vunpack.c.l.b16 %v916
    %v933 = vunpack.c.l.b16 %v917
    %v934 = vunpack.c.l.b16 %v918
    %v935 = vunpack.c.l.b16 %v919
    %v936 = vpack.c.b16 %v933, %v932
    %v937 = vpack.c.b16 %v935, %v934
    %v941 = vsel %vm146, %v920, 0
    %v944 = vsel %vm146, %v921, 0
    %v947 = vsel %vm146, %v922, 0
    %949 = vmatprep.subr.bf16.mxu0 0
    %950 = vmatpush1.bf16.msra.mxu0 0
    %951 = vmatprep.subr.bf16.mxu0 0
    %952 = vmatpush1.bf16.msra.mxu0 0
    %953 = vmatprep.subr.bf16.mxu0 0
    %954 = vmatpush1.bf16.msra.mxu0 0
    %955 = vmatprep.subr.bf16.mxu0 0
    %956 = vmatpush1.bf16.msra.mxu0 0
    %957 = vmatprep.subr.bf16.mxu0 0
    %958 = vmatpush1.bf16.msra.mxu0 0
    %959 = vmatprep.subr.bf16.mxu0 0
    %960 = vmatpush1.bf16.msra.mxu0 0
    %961 = vmatprep.subr.bf16.mxu0 0
    %962 = vmatpush1.bf16.msra.mxu0 %v937
    %963 = vmatprep.subr.bf16.mxu0 0
    %964 = vmatpush1.bf16.msra.mxu0 %v936
    %965 = vmatprep.subr.bf16.mxu0 0
    %966 = vmatpush2.bf16.msra.mxu0 0
    %967 = vmatprep.subr.bf16.mxu0 0
    %968 = vmatpush2.bf16.msra.mxu0 0
    %969 = vmatprep.subr.bf16.mxu0 0
    %970 = vmatpush2.bf16.msra.mxu0 0
    %971 = vmatprep.subr.bf16.mxu0 0
    %972 = vmatpush2.bf16.msra.mxu0 0
    %973 = vmatprep.subr.bf16.mxu0 0
    %974 = vmatpush2.bf16.msra.mxu0 0
    %975 = vmatprep.subr.bf16.mxu0 0
    %976 = vmatpush2.bf16.msra.mxu0 0
    %977 = vmatprep.subr.bf16.mxu0 0
    %978 = vmatpush2.bf16.msra.mxu0 0
    %979 = vmatprep.subr.bf16.mxu0 0
    %980 = vmatpush2.bf16.msra.mxu0 0
    %981 = vmatprep.mubr.bf16.mxu0 0
    %982 = vmatmul.mubr.bf16.gmra.mxu0 %v941
    %v983 = vpop.f32.mrf.mxu0
    %v984 = vadd.f32 %v927, %v983
    %v985 = vpop.f32.mrf.mxu0
    %v986 = vpop.f32.mrf.mxu0
    %v987 = vadd.f32 %v927, %v986
    %v988 = vpop.f32.mrf.mxu0
    %989 = vmatprep.mubr.bf16.mxu0 0
    %990 = vmatmul.mubr.bf16.gmra.mxu0 %v944
    %v991 = vpop.f32.mrf.mxu0
    %v992 = vadd.f32 %v927, %v991
    %v993 = vpop.f32.mrf.mxu0
    %v994 = vpop.f32.mrf.mxu0
    %v995 = vadd.f32 %v927, %v994
    %v996 = vpop.f32.mrf.mxu0
    %997 = vmatprep.mubr.bf16.mxu0 0
    %998 = vmatmul.mubr.bf16.gmra.mxu0 %v947
    %v999 = vpop.f32.mrf.mxu0
    %v1000 = vadd.f32 %v927, %v999
    %v1001 = vpop.f32.mrf.mxu0
    %v1002 = vpop.f32.mrf.mxu0
    %v1003 = vpop.f32.mrf.mxu0
    %1004 = vdwg.mxu0
    %v1005 = vmul.f32 %v984, %v984
    %v1006 = vmul.f32 %v987, %v987
    %v1007 = vmul.f32 %v992, %v992
    %v1008 = vmul.f32 %v995, %v995
    %v1009 = vmul.f32 %v1000, %v1000
    %v1010 = vmul.f32 %v984, %v1005
    %v1011 = vmul.f32 %v987, %v1006
    %v1012 = vmul.f32 %v992, %v1007
    %v1013 = vmul.f32 %v995, %v1008
    %v1014 = vmul.f32 %v1000, %v1009
    %v1015 = vmul.f32 %v1010, 0.044715
    %v1016 = vmul.f32 %v1011, 0.044715
    %v1017 = vmul.f32 %v1012, 0.044715
    %v1018 = vmul.f32 %v1013, 0.044715
    %v1019 = vmul.f32 %v1014, 0.044715
    %v1020 = vadd.f32 %v984, %v1015
    %v1021 = vadd.f32 %v987, %v1016
    %v1022 = vadd.f32 %v992, %v1017
    %v1023 = vadd.f32 %v995, %v1018
    %v1024 = vadd.f32 %v1000, %v1019
    %v1025 = vmul.f32 %v1020, 0.7978846
    %v1026 = vmul.f32 %v1021, 0.7978846
    %v1027 = vmul.f32 %v1022, 0.7978846
    %v1028 = vmul.f32 %v1023, 0.7978846
    %v1029 = vmul.f32 %v1024, 0.7978846
    %v1030 = vtanh.pop %v1025
    %v1031 = vtanh.pop %v1026
    %v1032 = vtanh.pop %v1027
    %v1033 = vtanh.pop %v1028
    %v1034 = vtanh.pop %v1029
    %v1035 = vadd.f32 %v1030, 1.0
    %v1036 = vadd.f32 %v1031, 1.0
    %v1037 = vadd.f32 %v1032, 1.0
    %v1038 = vadd.f32 %v1033, 1.0
    %v1039 = vadd.f32 %v1034, 1.0
    %v1040 = vmul.f32 %v1035, 0.5
    %v1041 = vmul.f32 %v1036, 0.5
    %v1042 = vmul.f32 %v1037, 0.5
    %v1043 = vmul.f32 %v1038, 0.5
    %v1044 = vmul.f32 %v1039, 0.5
    %v1045 = vmul.f32 %v984, %v1040
    %v1046 = vmul.f32 %v987, %v1041
    %v1047 = vmul.f32 %v992, %v1042
    %v1048 = vmul.f32 %v995, %v1043
    %v1049 = vmul.f32 %v1000, %v1044
    %v1050 = vld [vmem:[%s1 + $0x48] sm:$0xf]
    %v1051 = vld [vmem:[%s1 + $0x4c] sm:$0xf]
    %v1052 = vld [vmem:[%s1 + $0x50] sm:$0xf]
    %v1053 = vld [vmem:[%s1 + $0x54] sm:$0xf]
    %v1054 = vld [vmem:[%s1 + $0x58] sm:$0xf]
    %v1055 = vld [vmem:[%s1 + $0x5c] sm:$0xf]
    %v1056 = vld [vmem:[%s1 + $0x60] sm:$0xf]
    %v1057 = vld [vmem:[%s1 + $0x64] sm:$0xf]
    %v1058 = vld [vmem:[%s1 + $0x68] sm:$0xf]
    %v1059 = vld [vmem:[%s1 + $0x6c] sm:$0xf]
    %v1060 = vld [vmem:[%s1 + $0x70] sm:$0xf]
    %v1061 = vld [vmem:[%s1 + $0x74] sm:$0xf]
    %v1062 = vld [vmem:[%s1 + $0x78] sm:$0xf]
    %v1063 = vld [vmem:[%s1 + $0x7c] sm:$0xf]
    %v1064 = vld [vmem:[%s1 + $0x80] sm:$0xf]
    %v1065 = vld [vmem:[%s1 + $0x84] sm:$0xf]
    %v1066 = vpack.c.bf16 %v1046, %v1045
    %v1067 = vpack.c.bf16 %v1048, %v1047
    %v1068 = vpack.c.bf16 %v1049, %v1049
    %v1085 = vunpack.c.l.b16 %v1050
    %v1086 = vunpack.c.l.b16 %v1051
    %v1087 = vunpack.c.l.b16 %v1052
    %v1088 = vunpack.c.l.b16 %v1053
    %v1089 = vunpack.c.l.b16 %v1054
    %v1090 = vunpack.c.l.b16 %v1055
    %v1091 = vunpack.c.l.b16 %v1056
    %v1092 = vunpack.c.l.b16 %v1057
    %v1093 = vunpack.c.l.b16 %v1058
    %v1094 = vunpack.c.l.b16 %v1059
    %v1095 = vunpack.c.l.b16 %v1060
    %v1096 = vunpack.c.l.b16 %v1061
    %v1097 = vunpack.c.l.b16 %v1062
    %v1098 = vunpack.c.l.b16 %v1063
    %v1099 = vunpack.c.l.b16 %v1064
    %v1100 = vunpack.c.l.b16 %v1065
    %v1101 = vpack.c.b16 %v1086, %v1085
    %v1102 = vpack.c.b16 %v1088, %v1087
    %v1103 = vpack.c.b16 %v1090, %v1089
    %v1104 = vpack.c.b16 %v1092, %v1091
    %v1105 = vpack.c.b16 %v1094, %v1093
    %v1106 = vpack.c.b16 %v1096, %v1095
    %v1107 = vpack.c.b16 %v1098, %v1097
    %v1108 = vpack.c.b16 %v1100, %v1099
    %1117 = vmatprep.subr.bf16.mxu0 0
    %1118 = vmatpush1.bf16.msra.mxu0 %v1108
    %1119 = vmatprep.subr.bf16.mxu0 0
    %1120 = vmatpush1.bf16.msra.mxu0 %v1107
    %1121 = vmatprep.subr.bf16.mxu0 0
    %1122 = vmatpush1.bf16.msra.mxu0 %v1106
    %1123 = vmatprep.subr.bf16.mxu0 0
    %1124 = vmatpush1.bf16.msra.mxu0 %v1105
    %1125 = vmatprep.subr.bf16.mxu0 0
    %1126 = vmatpush1.bf16.msra.mxu0 %v1104
    %1127 = vmatprep.subr.bf16.mxu0 0
    %1128 = vmatpush1.bf16.msra.mxu0 %v1103
    %1129 = vmatprep.subr.bf16.mxu0 0
    %1130 = vmatpush1.bf16.msra.mxu0 %v1102
    %1131 = vmatprep.subr.bf16.mxu0 0
    %1132 = vmatpush1.bf16.msra.mxu0 %v1101
    %1133 = vmatprep.subr.bf16.mxu0 0
    %1134 = vmatpush2.bf16.msra.mxu0 0
    %1135 = vmatprep.subr.bf16.mxu0 0
    %1136 = vmatpush2.bf16.msra.mxu0 0
    %1137 = vmatprep.subr.bf16.mxu0 0
    %1138 = vmatpush2.bf16.msra.mxu0 0
    %1139 = vmatprep.subr.bf16.mxu0 0
    %1140 = vmatpush2.bf16.msra.mxu0 0
    %1141 = vmatprep.subr.bf16.mxu0 0
    %1142 = vmatpush2.bf16.msra.mxu0 0
    %1143 = vmatprep.subr.bf16.mxu0 0
    %1144 = vmatpush2.bf16.msra.mxu0 0
    %1145 = vmatprep.subr.bf16.mxu0 0
    %1146 = vmatpush2.bf16.msra.mxu0 0
    %1147 = vmatprep.subr.bf16.mxu0 0
    %1148 = vmatpush2.bf16.msra.mxu0 0
    %1149 = vmatprep.mubr.bf16.mxu0 0
    %1150 = vmatmul.mubr.bf16.gmra.mxu0 %v1066
    %v1151 = vpop.f32.mrf.mxu0
    %v1152 = vadd.f32 0.0, %v1151
    %v1153 = vpop.f32.mrf.mxu0
    %v1154 = vpop.f32.mrf.mxu0
    %v1155 = vadd.f32 0.0, %v1154
    %v1156 = vpop.f32.mrf.mxu0
    %1157 = vmatprep.mubr.bf16.mxu0 0
    %1158 = vmatmul.mubr.bf16.gmra.mxu0 %v1067
    %v1159 = vpop.f32.mrf.mxu0
    %v1160 = vadd.f32 0.0, %v1159
    %v1161 = vpop.f32.mrf.mxu0
    %v1162 = vpop.f32.mrf.mxu0
    %v1163 = vadd.f32 0.0, %v1162
    %v1164 = vpop.f32.mrf.mxu0
    %1165 = vmatprep.mubr.bf16.mxu0 0
    %1166 = vmatmul.mubr.bf16.gmra.mxu0 %v1068
    %v1167 = vpop.f32.mrf.mxu0
    %v1168 = vadd.f32 0.0, %v1167
    %v1169 = vpop.f32.mrf.mxu0
    %v1170 = vpop.f32.mrf.mxu0
    %v1171 = vpop.f32.mrf.mxu0
    %1172 = vdwg.mxu0
    %v1173 = vadd.f32 %v826, %v1152
    %v1174 = vadd.f32 %v827, %v1155
    %v1175 = vadd.f32 %v828, %v1160
    %v1176 = vadd.f32 %v829, %v1163
    %v1177 = vadd.f32 %v830, %v1168
    %v1178 = vld [vmem:[%s2 + $0x18] sm:$0x1]
    %v1179 = vlaneseq
    %v1180 = vshrl.u32 %v1179, 7
    %v1181 = vsub.s32 0, %v1180
    %v1182 = vrot.slane %v1178, %v1181
    %v1183 = vadd.f32 %v1173, %v1182
    %v1184 = vadd.f32 %v1174, %v1182
    %v1185 = vadd.f32 %v1175, %v1182
    %v1186 = vadd.f32 %v1176, %v1182
    %v1187 = vadd.f32 %v1177, %v1182
    %v1188 = vld [vmem:[%s2 + $0x19] sm:$0x1]
    %v1189 = vld [vmem:[%s2 + $0x1a] sm:$0x1]
    %v1190 = vsel %vm146, %v1183, 0.0
    %1191 = vadd.xlane.f32.xlu0 %v1190
    %v1192 = vpop.xlane.xlu0 %1191
    %v1193 = vsel %vm146, %v1184, 0.0
    %1194 = vadd.xlane.f32.xlu0 %v1193
    %v1195 = vpop.xlane.xlu0 %1194
    %v1196 = vsel %vm146, %v1185, 0.0
    %1197 = vadd.xlane.f32.xlu0 %v1196
    %v1198 = vpop.xlane.xlu0 %1197
    %v1199 = vsel %vm146, %v1186, 0.0
    %1200 = vadd.xlane.f32.xlu0 %v1199
    %v1201 = vpop.xlane.xlu0 %1200
    %v1202 = vsel %vm159, %v1187, 0.0
    %1203 = vadd.xlane.f32.xlu0 %v1202
    %v1204 = vpop.xlane.xlu0 %1203
    %v1205 = vmul.f32 %v1192, %v163
    %v1206 = vmul.f32 %v1195, %v163
    %v1207 = vmul.f32 %v1198, %v163
    %v1208 = vmul.f32 %v1201, %v163
    %v1209 = vmul.f32 %v1204, %v163
    %v1210 = vsub.f32 %v1183, %v1205
    %v1211 = vsub.f32 %v1184, %v1206
    %v1212 = vsub.f32 %v1185, %v1207
    %v1213 = vsub.f32 %v1186, %v1208
    %v1214 = vsub.f32 %v1187, %v1209
    %v1215 = vmul.f32 %v1210, %v1210
    %v1216 = vmul.f32 %v1211, %v1211
    %v1217 = vmul.f32 %v1212, %v1212
    %v1218 = vmul.f32 %v1213, %v1213
    %v1219 = vmul.f32 %v1214, %v1214
    %v1220 = vsel %vm146, %v1215, 0.0
    %1221 = vadd.xlane.f32.xlu0 %v1220
    %v1222 = vpop.xlane.xlu0 %1221
    %v1223 = vsel %vm146, %v1216, 0.0
    %1224 = vadd.xlane.f32.xlu0 %v1223
    %v1225 = vpop.xlane.xlu0 %1224
    %v1226 = vsel %vm146, %v1217, 0.0
    %1227 = vadd.xlane.f32.xlu0 %v1226
    %v1228 = vpop.xlane.xlu0 %1227
    %v1229 = vsel %vm146, %v1218, 0.0
    %1230 = vadd.xlane.f32.xlu0 %v1229
    %v1231 = vpop.xlane.xlu0 %1230
    %v1232 = vsel %vm159, %v1219, 0.0
    %1233 = vadd.xlane.f32.xlu0 %v1232
    %v1234 = vpop.xlane.xlu0 %1233
    %v1235 = vmul.f32 %v1222, %v163
    %v1236 = vmul.f32 %v1225, %v163
    %v1237 = vmul.f32 %v1228, %v163
    %v1238 = vmul.f32 %v1231, %v163
    %v1239 = vmul.f32 %v1234, %v163
    %v1240 = vadd.f32 %v1235, 1e-06
    %v1241 = vadd.f32 %v1236, 1e-06
    %v1242 = vadd.f32 %v1237, 1e-06
    %v1243 = vadd.f32 %v1238, 1e-06
    %v1244 = vadd.f32 %v1239, 1e-06
    %v1245 = vrsqrt.pop %v1240
    %v1246 = vrsqrt.pop %v1241
    %v1247 = vrsqrt.pop %v1242
    %v1248 = vrsqrt.pop %v1243
    %v1249 = vrsqrt.pop %v1244
    %v1250 = vmul.f32 %v1210, %v1245
    %v1251 = vmul.f32 %v1211, %v1246
    %v1252 = vmul.f32 %v1212, %v1247
    %v1253 = vmul.f32 %v1213, %v1248
    %v1254 = vmul.f32 %v1214, %v1249
    %v1255 = vlaneseq
    %v1256 = vshrl.u32 %v1255, 7
    %v1257 = vsub.s32 0, %v1256
    %v1258 = vrot.slane %v1188, %v1257
    %v1259 = vmul.f32 %v1250, %v1258
    %v1260 = vmul.f32 %v1251, %v1258
    %v1261 = vmul.f32 %v1252, %v1258
    %v1262 = vmul.f32 %v1253, %v1258
    %v1263 = vmul.f32 %v1254, %v1258
    %v1264 = vlaneseq
    %v1265 = vshrl.u32 %v1264, 7
    %v1266 = vsub.s32 0, %v1265
    %v1267 = vrot.slane %v1189, %v1266
    %v1268 = vadd.f32 %v1259, %v1267
    %v1269 = vadd.f32 %v1260, %v1267
    %v1270 = vadd.f32 %v1261, %v1267
    %v1271 = vadd.f32 %v1262, %v1267
    %v1272 = vadd.f32 %v1263, %v1267
    %v1273 = vld [vmem:[%s1 + $0x88] sm:$0xf]
    %v1274 = vld [vmem:[%s1 + $0x8c] sm:$0xf]
    %v1275 = vld [vmem:[%s1 + $0x90] sm:$0xf]
    %v1276 = vld [vmem:[%s1 + $0x94] sm:$0xf]
    %v1277 = vpack.c.bf16 %v1269, %v1268
    %v1278 = vpack.c.bf16 %v1271, %v1270
    %v1279 = vpack.c.bf16 %v1272, %v1272
    %v1280 = vld [vmem:[%s2 + $0x1b] sm:$0x1]
    %v1281 = vlaneseq
    %v1282 = vshrl.u32 %v1281, 7
    %v1283 = vsub.s32 0, %v1282
    %v1284 = vrot.slane %v1280, %v1283
    %v1289 = vunpack.c.l.b16 %v1273
    %v1290 = vunpack.c.l.b16 %v1274
    %v1291 = vunpack.c.l.b16 %v1275
    %v1292 = vunpack.c.l.b16 %v1276
    %v1293 = vpack.c.b16 %v1290, %v1289
    %v1294 = vpack.c.b16 %v1292, %v1291
    %v1298 = vsel %vm146, %v1277, 0
    %v1301 = vsel %vm146, %v1278, 0
    %v1304 = vsel %vm146, %v1279, 0
    %1306 = vmatprep.subr.bf16.mxu0 0
    %1307 = vmatpush1.bf16.msra.mxu0 0
    %1308 = vmatprep.subr.bf16.mxu0 0
    %1309 = vmatpush1.bf16.msra.mxu0 0
    %1310 = vmatprep.subr.bf16.mxu0 0
    %1311 = vmatpush1.bf16.msra.mxu0 0
    %1312 = vmatprep.subr.bf16.mxu0 0
    %1313 = vmatpush1.bf16.msra.mxu0 0
    %1314 = vmatprep.subr.bf16.mxu0 0
    %1315 = vmatpush1.bf16.msra.mxu0 0
    %1316 = vmatprep.subr.bf16.mxu0 0
    %1317 = vmatpush1.bf16.msra.mxu0 0
    %1318 = vmatprep.subr.bf16.mxu0 0
    %1319 = vmatpush1.bf16.msra.mxu0 %v1294
    %1320 = vmatprep.subr.bf16.mxu0 0
    %1321 = vmatpush1.bf16.msra.mxu0 %v1293
    %1322 = vmatprep.subr.bf16.mxu0 0
    %1323 = vmatpush2.bf16.msra.mxu0 0
    %1324 = vmatprep.subr.bf16.mxu0 0
    %1325 = vmatpush2.bf16.msra.mxu0 0
    %1326 = vmatprep.subr.bf16.mxu0 0
    %1327 = vmatpush2.bf16.msra.mxu0 0
    %1328 = vmatprep.subr.bf16.mxu0 0
    %1329 = vmatpush2.bf16.msra.mxu0 0
    %1330 = vmatprep.subr.bf16.mxu0 0
    %1331 = vmatpush2.bf16.msra.mxu0 0
    %1332 = vmatprep.subr.bf16.mxu0 0
    %1333 = vmatpush2.bf16.msra.mxu0 0
    %1334 = vmatprep.subr.bf16.mxu0 0
    %1335 = vmatpush2.bf16.msra.mxu0 0
    %1336 = vmatprep.subr.bf16.mxu0 0
    %1337 = vmatpush2.bf16.msra.mxu0 0
    %1338 = vmatprep.mubr.bf16.mxu0 0
    %1339 = vmatmul.mubr.bf16.gmra.mxu0 %v1298
    %v1340 = vpop.f32.mrf.mxu0
    %v1341 = vadd.f32 %v1284, %v1340
    %v1342 = vpop.f32.mrf.mxu0
    %v1343 = vpop.f32.mrf.mxu0
    %v1344 = vadd.f32 %v1284, %v1343
    %v1345 = vpop.f32.mrf.mxu0
    %1346 = vmatprep.mubr.bf16.mxu0 0
    %1347 = vmatmul.mubr.bf16.gmra.mxu0 %v1301
    %v1348 = vpop.f32.mrf.mxu0
    %v1349 = vadd.f32 %v1284, %v1348
    %v1350 = vpop.f32.mrf.mxu0
    %v1351 = vpop.f32.mrf.mxu0
    %v1352 = vadd.f32 %v1284, %v1351
    %v1353 = vpop.f32.mrf.mxu0
    %1354 = vmatprep.mubr.bf16.mxu0 0
    %1355 = vmatmul.mubr.bf16.gmra.mxu0 %v1304
    %v1356 = vpop.f32.mrf.mxu0
    %v1357 = vadd.f32 %v1284, %v1356
    %v1358 = vpop.f32.mrf.mxu0
    %v1359 = vpop.f32.mrf.mxu0
    %v1360 = vpop.f32.mrf.mxu0
    %1361 = vdwg.mxu0
    %v1367 = vrot.slane %v1341, 6
    %v1368 = vrot.slane %v1344, 6
    %v1369 = vsel %vm121, %v1367, %v1368
    %v1370 = vrot.slane %v1349, 6
    %v1371 = vsel %vm121, %v1368, %v1370
    %v1372 = vrot.slane %v1352, 6
    %v1373 = vsel %vm121, %v1370, %v1372
    %v1374 = vrot.slane %v1357, 6
    %v1375 = vsel %vm121, %v1372, %v1374
    %1376 = vrot.lane.b32.xlu0 %v1367, 112
    %v1377 = vpop.permute.xlu0 %1376
    %1378 = vrot.lane.b32.xlu0 %v1369, 112
    %v1379 = vpop.permute.xlu0 %1378
    %1380 = vrot.lane.b32.xlu0 %v1371, 112
    %v1381 = vpop.permute.xlu0 %1380
    %1382 = vrot.lane.b32.xlu0 %v1373, 112
    %v1383 = vpop.permute.xlu0 %1382
    %1384 = vrot.lane.b32.xlu0 %v1375, 112
    %v1385 = vpop.permute.xlu0 %1384
    %v1391 = vsel %vm121, %v1357, %v1377
    %v1392 = vpack.c.bf16 %v1344, %v1341
    %v1393 = vpack.c.bf16 %v1352, %v1349
    %v1394 = vpack.c.bf16 %v1379, %v1391
    %v1395 = vpack.c.bf16 %v1383, %v1381
    %v1396 = vpack.c.bf16 %v1385, %v1385
    %1402 = vrot.lane.b32.xlu0 %v1392, 96
    %v1403 = vpop.permute.xlu0 %1402
    %1404 = vrot.lane.b32.xlu0 %v1393, 96
    %v1405 = vpop.permute.xlu0 %1404
    %1406 = vrot.lane.b32.xlu0 %v1394, 96
    %v1407 = vpop.permute.xlu0 %1406
    %1408 = vrot.lane.b32.xlu0 %v1395, 96
    %v1409 = vpop.permute.xlu0 %1408
    %1410 = vrot.lane.b32.xlu0 %v1396, 96
    %v1411 = vpop.permute.xlu0 %1410
    %v1413 = vsel %vm371, %v1392, 0
    %v1416 = vsel %vm371, %v1393, 0
    %v1419 = vsel %vm371, %v1394, 0
    %v1422 = vsel %vm371, %v1395, 0
    %v1425 = vsel %vm371, %v1396, 0
    %v1428 = vsel %vm371, %v1403, 0
    %v1431 = vsel %vm371, %v1405, 0
    %v1434 = vsel %vm371, %v1407, 0
    %v1437 = vsel %vm371, %v1409, 0
    %v1440 = vsel %vm371, %v1411, 0
    %1442 = vmatprep.subr.bf16.mxu0 0
    %1443 = vmatpush1.bf16.xpose.msra.mxu0 0
    %1444 = vmatprep.subr.bf16.mxu0 0
    %1445 = vmatpush1.bf16.xpose.msra.mxu0 0
    %1446 = vmatprep.subr.bf16.mxu0 0
    %1447 = vmatpush1.bf16.xpose.msra.mxu0 0
    %1448 = vmatprep.subr.bf16.mxu0 0
    %1449 = vmatpush1.bf16.xpose.msra.mxu0 %v1440
    %1450 = vmatprep.subr.bf16.mxu0 0
    %1451 = vmatpush1.bf16.xpose.msra.mxu0 %v1437
    %1452 = vmatprep.subr.bf16.mxu0 0
    %1453 = vmatpush1.bf16.xpose.msra.mxu0 %v1434
    %1454 = vmatprep.subr.bf16.mxu0 0
    %1455 = vmatpush1.bf16.xpose.msra.mxu0 %v1431
    %1456 = vmatprep.subr.bf16.mxu0 0
    %1457 = vmatpush1.bf16.xpose.msra.mxu0 %v1428
    %1458 = vmatprep.subr.bf16.mxu0 0
    %1459 = vmatpush2.bf16.xpose.msra.mxu0 0
    %1460 = vmatprep.subr.bf16.mxu0 0
    %1461 = vmatpush2.bf16.xpose.msra.mxu0 0
    %1462 = vmatprep.subr.bf16.mxu0 0
    %1463 = vmatpush2.bf16.xpose.msra.mxu0 0
    %1464 = vmatprep.subr.bf16.mxu0 0
    %1465 = vmatpush2.bf16.xpose.msra.mxu0 0
    %1466 = vmatprep.subr.bf16.mxu0 0
    %1467 = vmatpush2.bf16.xpose.msra.mxu0 0
    %1468 = vmatprep.subr.bf16.mxu0 0
    %1469 = vmatpush2.bf16.xpose.msra.mxu0 0
    %1470 = vmatprep.subr.bf16.mxu0 0
    %1471 = vmatpush2.bf16.xpose.msra.mxu0 0
    %1472 = vmatprep.subr.bf16.mxu0 0
    %1473 = vmatpush2.bf16.xpose.msra.mxu0 0
    %1474 = vmatprep.mubr.bf16.mxu0 0
    %1475 = vmatmul.mubr.bf16.gmra.mxu0 %v1413
    %v1476 = vpop.f32.mrf.mxu0
    %v1477 = vadd.f32 0.0, %v1476
    %v1478 = vpop.f32.mrf.mxu0
    %v1479 = vpop.f32.mrf.mxu0
    %v1480 = vadd.f32 0.0, %v1479
    %v1481 = vpop.f32.mrf.mxu0
    %1482 = vmatprep.mubr.bf16.mxu0 0
    %1483 = vmatmul.mubr.bf16.gmra.mxu0 %v1416
    %v1484 = vpop.f32.mrf.mxu0
    %v1485 = vadd.f32 0.0, %v1484
    %v1486 = vpop.f32.mrf.mxu0
    %v1487 = vpop.f32.mrf.mxu0
    %v1488 = vadd.f32 0.0, %v1487
    %v1489 = vpop.f32.mrf.mxu0
    %1490 = vmatprep.mubr.bf16.mxu0 0
    %1491 = vmatmul.mubr.bf16.gmra.mxu0 %v1419
    %v1492 = vpop.f32.mrf.mxu0
    %v1493 = vadd.f32 0.0, %v1492
    %v1494 = vpop.f32.mrf.mxu0
    %v1495 = vpop.f32.mrf.mxu0
    %v1496 = vadd.f32 0.0, %v1495
    %v1497 = vpop.f32.mrf.mxu0
    %1498 = vmatprep.mubr.bf16.mxu0 0
    %1499 = vmatmul.mubr.bf16.gmra.mxu0 %v1422
    %v1500 = vpop.f32.mrf.mxu0
    %v1501 = vadd.f32 0.0, %v1500
    %v1502 = vpop.f32.mrf.mxu0
    %v1503 = vpop.f32.mrf.mxu0
    %v1504 = vadd.f32 0.0, %v1503
    %v1505 = vpop.f32.mrf.mxu0
    %1506 = vmatprep.mubr.bf16.mxu0 0
    %1507 = vmatmul.mubr.bf16.gmra.mxu0 %v1425
    %v1508 = vpop.f32.mrf.mxu0
    %v1509 = vadd.f32 0.0, %v1508
    %v1510 = vpop.f32.mrf.mxu0
    %v1511 = vpop.f32.mrf.mxu0
    %v1512 = vpop.f32.mrf.mxu0
    %1513 = vdwg.mxu0
    %v1514 = vmul.f32 %v1477, 0.25
    %v1515 = vmul.f32 %v1480, 0.25
    %v1516 = vmul.f32 %v1485, 0.25
    %v1517 = vmul.f32 %v1488, 0.25
    %v1518 = vmul.f32 %v1493, 0.25
    %v1519 = vmul.f32 %v1496, 0.25
    %v1520 = vmul.f32 %v1501, 0.25
    %v1521 = vmul.f32 %v1504, 0.25
    %v1522 = vmul.f32 %v1509, 0.25
    %v1523 = vadd.f32 %v1514, %v135
    %v1524 = vadd.f32 %v1515, %v136
    %v1525 = vadd.f32 %v1516, %v137
    %v1526 = vadd.f32 %v1517, %v138
    %v1527 = vadd.f32 %v1518, %v139
    %v1528 = vadd.f32 %v1519, %v140
    %v1529 = vadd.f32 %v1520, %v141
    %v1530 = vadd.f32 %v1521, %v142
    %v1531 = vadd.f32 %v1522, %v143
    %v1532 = vsel %vm492, %v1523, -inf
    %1533 = vmax.xlane.f32.xlu0 %v1532
    %v1534 = vpop.xlane.xlu0 %1533
    %v1535 = vsel %vm492, %v1524, -inf
    %1536 = vmax.xlane.f32.xlu0 %v1535
    %v1537 = vpop.xlane.xlu0 %1536
    %v1538 = vsel %vm492, %v1525, -inf
    %1539 = vmax.xlane.f32.xlu0 %v1538
    %v1540 = vpop.xlane.xlu0 %1539
    %v1541 = vsel %vm492, %v1526, -inf
    %1542 = vmax.xlane.f32.xlu0 %v1541
    %v1543 = vpop.xlane.xlu0 %1542
    %v1544 = vsel %vm492, %v1527, -inf
    %1545 = vmax.xlane.f32.xlu0 %v1544
    %v1546 = vpop.xlane.xlu0 %1545
    %v1547 = vsel %vm492, %v1528, -inf
    %1548 = vmax.xlane.f32.xlu0 %v1547
    %v1549 = vpop.xlane.xlu0 %1548
    %v1550 = vsel %vm492, %v1529, -inf
    %1551 = vmax.xlane.f32.xlu0 %v1550
    %v1552 = vpop.xlane.xlu0 %1551
    %v1553 = vsel %vm492, %v1530, -inf
    %1554 = vmax.xlane.f32.xlu0 %v1553
    %v1555 = vpop.xlane.xlu0 %1554
    %v1556 = vsel %vm517, %v1531, -inf
    %1557 = vmax.xlane.f32.xlu0 %v1556
    %v1558 = vpop.xlane.xlu0 %1557
    %v1559 = vsub.f32 %v1523, %v1534
    %v1560 = vsub.f32 %v1524, %v1537
    %v1561 = vsub.f32 %v1525, %v1540
    %v1562 = vsub.f32 %v1526, %v1543
    %v1563 = vsub.f32 %v1527, %v1546
    %v1564 = vsub.f32 %v1528, %v1549
    %v1565 = vsub.f32 %v1529, %v1552
    %v1566 = vsub.f32 %v1530, %v1555
    %v1567 = vsub.f32 %v1531, %v1558
    %v1568 = vmul.f32 %v1559, 1.442695
    %v1569 = vpow.pop %v1568
    %v1570 = vmul.f32 %v1560, 1.442695
    %v1571 = vpow.pop %v1570
    %v1572 = vmul.f32 %v1561, 1.442695
    %v1573 = vpow.pop %v1572
    %v1574 = vmul.f32 %v1562, 1.442695
    %v1575 = vpow.pop %v1574
    %v1576 = vmul.f32 %v1563, 1.442695
    %v1577 = vpow.pop %v1576
    %v1578 = vmul.f32 %v1564, 1.442695
    %v1579 = vpow.pop %v1578
    %v1580 = vmul.f32 %v1565, 1.442695
    %v1581 = vpow.pop %v1580
    %v1582 = vmul.f32 %v1566, 1.442695
    %v1583 = vpow.pop %v1582
    %v1584 = vmul.f32 %v1567, 1.442695
    %v1585 = vpow.pop %v1584
    %v1586 = vsel %vm492, %v1569, 0.0
    %1587 = vadd.xlane.f32.xlu0 %v1586
    %v1588 = vpop.xlane.xlu0 %1587
    %v1589 = vsel %vm492, %v1571, 0.0
    %1590 = vadd.xlane.f32.xlu0 %v1589
    %v1591 = vpop.xlane.xlu0 %1590
    %v1592 = vsel %vm492, %v1573, 0.0
    %1593 = vadd.xlane.f32.xlu0 %v1592
    %v1594 = vpop.xlane.xlu0 %1593
    %v1595 = vsel %vm492, %v1575, 0.0
    %1596 = vadd.xlane.f32.xlu0 %v1595
    %v1597 = vpop.xlane.xlu0 %1596
    %v1598 = vsel %vm492, %v1577, 0.0
    %1599 = vadd.xlane.f32.xlu0 %v1598
    %v1600 = vpop.xlane.xlu0 %1599
    %v1601 = vsel %vm492, %v1579, 0.0
    %1602 = vadd.xlane.f32.xlu0 %v1601
    %v1603 = vpop.xlane.xlu0 %1602
    %v1604 = vsel %vm492, %v1581, 0.0
    %1605 = vadd.xlane.f32.xlu0 %v1604
    %v1606 = vpop.xlane.xlu0 %1605
    %v1607 = vsel %vm492, %v1583, 0.0
    %1608 = vadd.xlane.f32.xlu0 %v1607
    %v1609 = vpop.xlane.xlu0 %1608
    %v1610 = vsel %vm517, %v1585, 0.0
    %1611 = vadd.xlane.f32.xlu0 %v1610
    %v1612 = vpop.xlane.xlu0 %1611
    %v1613 = vrcp.pop %v1588
    %v1614 = vrcp.pop %v1591
    %v1615 = vrcp.pop %v1594
    %v1616 = vrcp.pop %v1597
    %v1617 = vrcp.pop %v1600
    %v1618 = vrcp.pop %v1603
    %v1619 = vrcp.pop %v1606
    %v1620 = vrcp.pop %v1609
    %v1621 = vrcp.pop %v1612
    %v1622 = vmul.f32 %v1569, %v1613
    %v1623 = vmul.f32 %v1571, %v1614
    %v1624 = vmul.f32 %v1573, %v1615
    %v1625 = vmul.f32 %v1575, %v1616
    %v1626 = vmul.f32 %v1577, %v1617
    %v1627 = vmul.f32 %v1579, %v1618
    %v1628 = vmul.f32 %v1581, %v1619
    %v1629 = vmul.f32 %v1583, %v1620
    %v1630 = vmul.f32 %v1585, %v1621
    %v1631 = vpack.c.bf16 %v1623, %v1622
    %v1632 = vpack.c.bf16 %v1625, %v1624
    %v1633 = vpack.c.bf16 %v1627, %v1626
    %v1634 = vpack.c.bf16 %v1629, %v1628
    %v1635 = vpack.c.bf16 %v1630, %v1630
    %1636 = vrot.lane.b32.xlu0 %v1392, 64
    %v1637 = vpop.permute.xlu0 %1636
    %1638 = vrot.lane.b32.xlu0 %v1393, 64
    %v1639 = vpop.permute.xlu0 %1638
    %1640 = vrot.lane.b32.xlu0 %v1394, 64
    %v1641 = vpop.permute.xlu0 %1640
    %1642 = vrot.lane.b32.xlu0 %v1395, 64
    %v1643 = vpop.permute.xlu0 %1642
    %1644 = vrot.lane.b32.xlu0 %v1396, 64
    %v1645 = vpop.permute.xlu0 %1644
    %v1651 = vsel %vm492, %v1631, 0
    %v1654 = vsel %vm492, %v1632, 0
    %v1657 = vsel %vm492, %v1633, 0
    %v1660 = vsel %vm492, %v1634, 0
    %v1663 = vsel %vm492, %v1635, 0
    %v1666 = vsel %vm121, %v1645, 0
    %1668 = vmatprep.subr.bf16.mxu0 0
    %1669 = vmatpush1.bf16.msra.mxu0 0
    %1670 = vmatprep.subr.bf16.mxu0 0
    %1671 = vmatpush1.bf16.msra.mxu0 0
    %1672 = vmatprep.subr.bf16.mxu0 0
    %1673 = vmatpush1.bf16.msra.mxu0 0
    %1674 = vmatprep.subr.bf16.mxu0 0
    %1675 = vmatpush1.bf16.msra.mxu0 %v1666
    %1676 = vmatprep.subr.bf16.mxu0 0
    %1677 = vmatpush1.bf16.msra.mxu0 %v1643
    %1678 = vmatprep.subr.bf16.mxu0 0
    %1679 = vmatpush1.bf16.msra.mxu0 %v1641
    %1680 = vmatprep.subr.bf16.mxu0 0
    %1681 = vmatpush1.bf16.msra.mxu0 %v1639
    %1682 = vmatprep.subr.bf16.mxu0 0
    %1683 = vmatpush1.bf16.msra.mxu0 %v1637
    %1684 = vmatprep.subr.bf16.mxu0 0
    %1685 = vmatpush2.bf16.msra.mxu0 0
    %1686 = vmatprep.subr.bf16.mxu0 0
    %1687 = vmatpush2.bf16.msra.mxu0 0
    %1688 = vmatprep.subr.bf16.mxu0 0
    %1689 = vmatpush2.bf16.msra.mxu0 0
    %1690 = vmatprep.subr.bf16.mxu0 0
    %1691 = vmatpush2.bf16.msra.mxu0 0
    %1692 = vmatprep.subr.bf16.mxu0 0
    %1693 = vmatpush2.bf16.msra.mxu0 0
    %1694 = vmatprep.subr.bf16.mxu0 0
    %1695 = vmatpush2.bf16.msra.mxu0 0
    %1696 = vmatprep.subr.bf16.mxu0 0
    %1697 = vmatpush2.bf16.msra.mxu0 0
    %1698 = vmatprep.subr.bf16.mxu0 0
    %1699 = vmatpush2.bf16.msra.mxu0 0
    %1700 = vmatprep.mubr.bf16.mxu0 0
    %1701 = vmatmul.mubr.bf16.gmra.mxu0 %v1651
    %v1702 = vpop.f32.mrf.mxu0
    %v1703 = vadd.f32 0.0, %v1702
    %v1704 = vpop.f32.mrf.mxu0
    %v1705 = vpop.f32.mrf.mxu0
    %v1706 = vadd.f32 0.0, %v1705
    %v1707 = vpop.f32.mrf.mxu0
    %1708 = vmatprep.mubr.bf16.mxu0 0
    %1709 = vmatmul.mubr.bf16.gmra.mxu0 %v1654
    %v1710 = vpop.f32.mrf.mxu0
    %v1711 = vadd.f32 0.0, %v1710
    %v1712 = vpop.f32.mrf.mxu0
    %v1713 = vpop.f32.mrf.mxu0
    %v1714 = vadd.f32 0.0, %v1713
    %v1715 = vpop.f32.mrf.mxu0
    %1716 = vmatprep.mubr.bf16.mxu0 0
    %1717 = vmatmul.mubr.bf16.gmra.mxu0 %v1657
    %v1718 = vpop.f32.mrf.mxu0
    %v1719 = vadd.f32 0.0, %v1718
    %v1720 = vpop.f32.mrf.mxu0
    %v1721 = vpop.f32.mrf.mxu0
    %v1722 = vadd.f32 0.0, %v1721
    %v1723 = vpop.f32.mrf.mxu0
    %1724 = vmatprep.mubr.bf16.mxu0 0
    %1725 = vmatmul.mubr.bf16.gmra.mxu0 %v1660
    %v1726 = vpop.f32.mrf.mxu0
    %v1727 = vadd.f32 0.0, %v1726
    %v1728 = vpop.f32.mrf.mxu0
    %v1729 = vpop.f32.mrf.mxu0
    %v1730 = vadd.f32 0.0, %v1729
    %v1731 = vpop.f32.mrf.mxu0
    %1732 = vmatprep.mubr.bf16.mxu0 0
    %1733 = vmatmul.mubr.bf16.gmra.mxu0 %v1663
    %v1734 = vpop.f32.mrf.mxu0
    %v1735 = vadd.f32 0.0, %v1734
    %v1736 = vpop.f32.mrf.mxu0
    %v1737 = vpop.f32.mrf.mxu0
    %v1738 = vpop.f32.mrf.mxu0
    %1739 = vdwg.mxu0
    %v1745 = vrot.slane %v1719, 2
    %v1746 = vrot.slane %v1722, 2
    %v1747 = vsel %vm707, %v1745, %v1746
    %v1748 = vrot.slane %v1727, 2
    %v1749 = vsel %vm707, %v1746, %v1748
    %v1750 = vrot.slane %v1730, 2
    %v1751 = vsel %vm707, %v1748, %v1750
    %v1752 = vrot.slane %v1735, 2
    %v1753 = vsel %vm707, %v1750, %v1752
    %1754 = vrot.lane.b32.xlu0 %v1747, 16
    %v1755 = vpop.permute.xlu0 %1754
    %1756 = vrot.lane.b32.xlu0 %v1749, 16
    %v1757 = vpop.permute.xlu0 %1756
    %1758 = vrot.lane.b32.xlu0 %v1751, 16
    %v1759 = vpop.permute.xlu0 %1758
    %1760 = vrot.lane.b32.xlu0 %v1753, 16
    %v1761 = vpop.permute.xlu0 %1760
    %1762 = vrot.lane.b32.xlu0 %v1752, 16
    %v1763 = vpop.permute.xlu0 %1762
    %v1769 = vsel %vm371, %v1703, %v1755
    %v1770 = vsel %vm371, %v1706, %v1757
    %v1771 = vsel %vm371, %v1711, %v1759
    %v1772 = vsel %vm371, %v1714, %v1761
    %v1773 = vsel %vm371, %v1719, %v1763
    %v1774 = vld [vmem:[%s1 + $0x98] sm:$0xf]
    %v1775 = vld [vmem:[%s1 + $0x9c] sm:$0xf]
    %v1776 = vld [vmem:[%s1 + $0xa0] sm:$0xf]
    %v1777 = vld [vmem:[%s1 + $0xa4] sm:$0xf]
    %v1778 = vpack.c.bf16 %v1770, %v1769
    %v1779 = vpack.c.bf16 %v1772, %v1771
    %v1780 = vpack.c.bf16 %v1773, %v1773
    %v1781 = vld [vmem:[%s2 + $0x1c] sm:$0x1]
    %v1782 = vlaneseq
    %v1783 = vshrl.u32 %v1782, 7
    %v1784 = vsub.s32 0, %v1783
    %v1785 = vrot.slane %v1781, %v1784
    %v1790 = vunpack.c.l.b16 %v1774
    %v1791 = vunpack.c.l.b16 %v1775
    %v1792 = vunpack.c.l.b16 %v1776
    %v1793 = vunpack.c.l.b16 %v1777
    %v1794 = vpack.c.b16 %v1791, %v1790
    %v1795 = vpack.c.b16 %v1793, %v1792
    %v1799 = vsel %vm146, %v1778, 0
    %v1802 = vsel %vm146, %v1779, 0
    %v1805 = vsel %vm146, %v1780, 0
    %1807 = vmatprep.subr.bf16.mxu0 0
    %1808 = vmatpush1.bf16.msra.mxu0 0
    %1809 = vmatprep.subr.bf16.mxu0 0
    %1810 = vmatpush1.bf16.msra.mxu0 0
    %1811 = vmatprep.subr.bf16.mxu0 0
    %1812 = vmatpush1.bf16.msra.mxu0 0
    %1813 = vmatprep.subr.bf16.mxu0 0
    %1814 = vmatpush1.bf16.msra.mxu0 0
    %1815 = vmatprep.subr.bf16.mxu0 0
    %1816 = vmatpush1.bf16.msra.mxu0 0
    %1817 = vmatprep.subr.bf16.mxu0 0
    %1818 = vmatpush1.bf16.msra.mxu0 0
    %1819 = vmatprep.subr.bf16.mxu0 0
    %1820 = vmatpush1.bf16.msra.mxu0 %v1795
    %1821 = vmatprep.subr.bf16.mxu0 0
    %1822 = vmatpush1.bf16.msra.mxu0 %v1794
    %1823 = vmatprep.subr.bf16.mxu0 0
    %1824 = vmatpush2.bf16.msra.mxu0 0
    %1825 = vmatprep.subr.bf16.mxu0 0
    %1826 = vmatpush2.bf16.msra.mxu0 0
    %1827 = vmatprep.subr.bf16.mxu0 0
    %1828 = vmatpush2.bf16.msra.mxu0 0
    %1829 = vmatprep.subr.bf16.mxu0 0
    %1830 = vmatpush2.bf16.msra.mxu0 0
    %1831 = vmatprep.subr.bf16.mxu0 0
    %1832 = vmatpush2.bf16.msra.mxu0 0
    %1833 = vmatprep.subr.bf16.mxu0 0
    %1834 = vmatpush2.bf16.msra.mxu0 0
    %1835 = vmatprep.subr.bf16.mxu0 0
    %1836 = vmatpush2.bf16.msra.mxu0 0
    %1837 = vmatprep.subr.bf16.mxu0 0
    %1838 = vmatpush2.bf16.msra.mxu0 0
    %1839 = vmatprep.mubr.bf16.mxu0 0
    %1840 = vmatmul.mubr.bf16.gmra.mxu0 %v1799
    %v1841 = vpop.f32.mrf.mxu0
    %v1842 = vadd.f32 %v1785, %v1841
    %v1843 = vpop.f32.mrf.mxu0
    %v1844 = vpop.f32.mrf.mxu0
    %v1845 = vadd.f32 %v1785, %v1844
    %v1846 = vpop.f32.mrf.mxu0
    %1847 = vmatprep.mubr.bf16.mxu0 0
    %1848 = vmatmul.mubr.bf16.gmra.mxu0 %v1802
    %v1849 = vpop.f32.mrf.mxu0
    %v1850 = vadd.f32 %v1785, %v1849
    %v1851 = vpop.f32.mrf.mxu0
    %v1852 = vpop.f32.mrf.mxu0
    %v1853 = vadd.f32 %v1785, %v1852
    %v1854 = vpop.f32.mrf.mxu0
    %1855 = vmatprep.mubr.bf16.mxu0 0
    %1856 = vmatmul.mubr.bf16.gmra.mxu0 %v1805
    %v1857 = vpop.f32.mrf.mxu0
    %v1858 = vadd.f32 %v1785, %v1857
    %v1859 = vpop.f32.mrf.mxu0
    %v1860 = vpop.f32.mrf.mxu0
    %v1861 = vpop.f32.mrf.mxu0
    %1862 = vdwg.mxu0
    %v1863 = vadd.f32 %v1183, %v1842
    %v1864 = vadd.f32 %v1184, %v1845
    %v1865 = vadd.f32 %v1185, %v1850
    %v1866 = vadd.f32 %v1186, %v1853
    %v1867 = vadd.f32 %v1187, %v1858
    %v1868 = vld [vmem:[%s2 + $0x1d] sm:$0x1]
    %v1869 = vld [vmem:[%s2 + $0x1e] sm:$0x1]
    %v1870 = vsel %vm146, %v1863, 0.0
    %1871 = vadd.xlane.f32.xlu0 %v1870
    %v1872 = vpop.xlane.xlu0 %1871
    %v1873 = vsel %vm146, %v1864, 0.0
    %1874 = vadd.xlane.f32.xlu0 %v1873
    %v1875 = vpop.xlane.xlu0 %1874
    %v1876 = vsel %vm146, %v1865, 0.0
    %1877 = vadd.xlane.f32.xlu0 %v1876
    %v1878 = vpop.xlane.xlu0 %1877
    %v1879 = vsel %vm146, %v1866, 0.0
    %1880 = vadd.xlane.f32.xlu0 %v1879
    %v1881 = vpop.xlane.xlu0 %1880
    %v1882 = vsel %vm159, %v1867, 0.0
    %1883 = vadd.xlane.f32.xlu0 %v1882
    %v1884 = vpop.xlane.xlu0 %1883
    %v1885 = vmul.f32 %v1872, %v163
    %v1886 = vmul.f32 %v1875, %v163
    %v1887 = vmul.f32 %v1878, %v163
    %v1888 = vmul.f32 %v1881, %v163
    %v1889 = vmul.f32 %v1884, %v163
    %v1890 = vsub.f32 %v1863, %v1885
    %v1891 = vsub.f32 %v1864, %v1886
    %v1892 = vsub.f32 %v1865, %v1887
    %v1893 = vsub.f32 %v1866, %v1888
    %v1894 = vsub.f32 %v1867, %v1889
    %v1895 = vmul.f32 %v1890, %v1890
    %v1896 = vmul.f32 %v1891, %v1891
    %v1897 = vmul.f32 %v1892, %v1892
    %v1898 = vmul.f32 %v1893, %v1893
    %v1899 = vmul.f32 %v1894, %v1894
    %v1900 = vsel %vm146, %v1895, 0.0
    %1901 = vadd.xlane.f32.xlu0 %v1900
    %v1902 = vpop.xlane.xlu0 %1901
    %v1903 = vsel %vm146, %v1896, 0.0
    %1904 = vadd.xlane.f32.xlu0 %v1903
    %v1905 = vpop.xlane.xlu0 %1904
    %v1906 = vsel %vm146, %v1897, 0.0
    %1907 = vadd.xlane.f32.xlu0 %v1906
    %v1908 = vpop.xlane.xlu0 %1907
    %v1909 = vsel %vm146, %v1898, 0.0
    %1910 = vadd.xlane.f32.xlu0 %v1909
    %v1911 = vpop.xlane.xlu0 %1910
    %v1912 = vsel %vm159, %v1899, 0.0
    %1913 = vadd.xlane.f32.xlu0 %v1912
    %v1914 = vpop.xlane.xlu0 %1913
    %v1915 = vmul.f32 %v1902, %v163
    %v1916 = vmul.f32 %v1905, %v163
    %v1917 = vmul.f32 %v1908, %v163
    %v1918 = vmul.f32 %v1911, %v163
    %v1919 = vmul.f32 %v1914, %v163
    %v1920 = vadd.f32 %v1915, 1e-06
    %v1921 = vadd.f32 %v1916, 1e-06
    %v1922 = vadd.f32 %v1917, 1e-06
    %v1923 = vadd.f32 %v1918, 1e-06
    %v1924 = vadd.f32 %v1919, 1e-06
    %v1925 = vrsqrt.pop %v1920
    %v1926 = vrsqrt.pop %v1921
    %v1927 = vrsqrt.pop %v1922
    %v1928 = vrsqrt.pop %v1923
    %v1929 = vrsqrt.pop %v1924
    %v1930 = vmul.f32 %v1890, %v1925
    %v1931 = vmul.f32 %v1891, %v1926
    %v1932 = vmul.f32 %v1892, %v1927
    %v1933 = vmul.f32 %v1893, %v1928
    %v1934 = vmul.f32 %v1894, %v1929
    %v1935 = vlaneseq
    %v1936 = vshrl.u32 %v1935, 7
    %v1937 = vsub.s32 0, %v1936
    %v1938 = vrot.slane %v1868, %v1937
    %v1939 = vmul.f32 %v1930, %v1938
    %v1940 = vmul.f32 %v1931, %v1938
    %v1941 = vmul.f32 %v1932, %v1938
    %v1942 = vmul.f32 %v1933, %v1938
    %v1943 = vmul.f32 %v1934, %v1938
    %v1944 = vlaneseq
    %v1945 = vshrl.u32 %v1944, 7
    %v1946 = vsub.s32 0, %v1945
    %v1947 = vrot.slane %v1869, %v1946
    %v1948 = vadd.f32 %v1939, %v1947
    %v1949 = vadd.f32 %v1940, %v1947
    %v1950 = vadd.f32 %v1941, %v1947
    %v1951 = vadd.f32 %v1942, %v1947
    %v1952 = vadd.f32 %v1943, %v1947
    %v1953 = vld [vmem:[%s1 + $0xa8] sm:$0xf]
    %v1954 = vld [vmem:[%s1 + $0xac] sm:$0xf]
    %v1955 = vld [vmem:[%s1 + $0xb0] sm:$0xf]
    %v1956 = vld [vmem:[%s1 + $0xb4] sm:$0xf]
    %v1957 = vpack.c.bf16 %v1949, %v1948
    %v1958 = vpack.c.bf16 %v1951, %v1950
    %v1959 = vpack.c.bf16 %v1952, %v1952
    %v1960 = vld [vmem:[%s2 + $0x1f] sm:$0x1]
    %v1961 = vlaneseq
    %v1962 = vshrl.u32 %v1961, 7
    %v1963 = vsub.s32 0, %v1962
    %v1964 = vrot.slane %v1960, %v1963
    %v1969 = vunpack.c.l.b16 %v1953
    %v1970 = vunpack.c.l.b16 %v1954
    %v1971 = vunpack.c.l.b16 %v1955
    %v1972 = vunpack.c.l.b16 %v1956
    %v1973 = vpack.c.b16 %v1970, %v1969
    %v1974 = vpack.c.b16 %v1972, %v1971
    %v1978 = vsel %vm146, %v1957, 0
    %v1981 = vsel %vm146, %v1958, 0
    %v1984 = vsel %vm146, %v1959, 0
    %1986 = vmatprep.subr.bf16.mxu0 0
    %1987 = vmatpush1.bf16.msra.mxu0 0
    %1988 = vmatprep.subr.bf16.mxu0 0
    %1989 = vmatpush1.bf16.msra.mxu0 0
    %1990 = vmatprep.subr.bf16.mxu0 0
    %1991 = vmatpush1.bf16.msra.mxu0 0
    %1992 = vmatprep.subr.bf16.mxu0 0
    %1993 = vmatpush1.bf16.msra.mxu0 0
    %1994 = vmatprep.subr.bf16.mxu0 0
    %1995 = vmatpush1.bf16.msra.mxu0 0
    %1996 = vmatprep.subr.bf16.mxu0 0
    %1997 = vmatpush1.bf16.msra.mxu0 0
    %1998 = vmatprep.subr.bf16.mxu0 0
    %1999 = vmatpush1.bf16.msra.mxu0 %v1974
    %2000 = vmatprep.subr.bf16.mxu0 0
    %2001 = vmatpush1.bf16.msra.mxu0 %v1973
    %2002 = vmatprep.subr.bf16.mxu0 0
    %2003 = vmatpush2.bf16.msra.mxu0 0
    %2004 = vmatprep.subr.bf16.mxu0 0
    %2005 = vmatpush2.bf16.msra.mxu0 0
    %2006 = vmatprep.subr.bf16.mxu0 0
    %2007 = vmatpush2.bf16.msra.mxu0 0
    %2008 = vmatprep.subr.bf16.mxu0 0
    %2009 = vmatpush2.bf16.msra.mxu0 0
    %2010 = vmatprep.subr.bf16.mxu0 0
    %2011 = vmatpush2.bf16.msra.mxu0 0
    %2012 = vmatprep.subr.bf16.mxu0 0
    %2013 = vmatpush2.bf16.msra.mxu0 0
    %2014 = vmatprep.subr.bf16.mxu0 0
    %2015 = vmatpush2.bf16.msra.mxu0 0
    %2016 = vmatprep.subr.bf16.mxu0 0
    %2017 = vmatpush2.bf16.msra.mxu0 0
    %2018 = vmatprep.mubr.bf16.mxu0 0
    %2019 = vmatmul.mubr.bf16.gmra.mxu0 %v1978
    %v2020 = vpop.f32.mrf.mxu0
    %v2021 = vadd.f32 %v1964, %v2020
    %v2022 = vpop.f32.mrf.mxu0
    %v2023 = vpop.f32.mrf.mxu0
    %v2024 = vadd.f32 %v1964, %v2023
    %v2025 = vpop.f32.mrf.mxu0
    %2026 = vmatprep.mubr.bf16.mxu0 0
    %2027 = vmatmul.mubr.bf16.gmra.mxu0 %v1981
    %v2028 = vpop.f32.mrf.mxu0
    %v2029 = vadd.f32 %v1964, %v2028
    %v2030 = vpop.f32.mrf.mxu0
    %v2031 = vpop.f32.mrf.mxu0
    %v2032 = vadd.f32 %v1964, %v2031
    %v2033 = vpop.f32.mrf.mxu0
    %2034 = vmatprep.mubr.bf16.mxu0 0
    %2035 = vmatmul.mubr.bf16.gmra.mxu0 %v1984
    %v2036 = vpop.f32.mrf.mxu0
    %v2037 = vadd.f32 %v1964, %v2036
    %v2038 = vpop.f32.mrf.mxu0
    %v2039 = vpop.f32.mrf.mxu0
    %v2040 = vpop.f32.mrf.mxu0
    %2041 = vdwg.mxu0
    %v2042 = vmul.f32 %v2021, %v2021
    %v2043 = vmul.f32 %v2024, %v2024
    %v2044 = vmul.f32 %v2029, %v2029
    %v2045 = vmul.f32 %v2032, %v2032
    %v2046 = vmul.f32 %v2037, %v2037
    %v2047 = vmul.f32 %v2021, %v2042
    %v2048 = vmul.f32 %v2024, %v2043
    %v2049 = vmul.f32 %v2029, %v2044
    %v2050 = vmul.f32 %v2032, %v2045
    %v2051 = vmul.f32 %v2037, %v2046
    %v2052 = vmul.f32 %v2047, 0.044715
    %v2053 = vmul.f32 %v2048, 0.044715
    %v2054 = vmul.f32 %v2049, 0.044715
    %v2055 = vmul.f32 %v2050, 0.044715
    %v2056 = vmul.f32 %v2051, 0.044715
    %v2057 = vadd.f32 %v2021, %v2052
    %v2058 = vadd.f32 %v2024, %v2053
    %v2059 = vadd.f32 %v2029, %v2054
    %v2060 = vadd.f32 %v2032, %v2055
    %v2061 = vadd.f32 %v2037, %v2056
    %v2062 = vmul.f32 %v2057, 0.7978846
    %v2063 = vmul.f32 %v2058, 0.7978846
    %v2064 = vmul.f32 %v2059, 0.7978846
    %v2065 = vmul.f32 %v2060, 0.7978846
    %v2066 = vmul.f32 %v2061, 0.7978846
    %v2067 = vtanh.pop %v2062
    %v2068 = vtanh.pop %v2063
    %v2069 = vtanh.pop %v2064
    %v2070 = vtanh.pop %v2065
    %v2071 = vtanh.pop %v2066
    %v2072 = vadd.f32 %v2067, 1.0
    %v2073 = vadd.f32 %v2068, 1.0
    %v2074 = vadd.f32 %v2069, 1.0
    %v2075 = vadd.f32 %v2070, 1.0
    %v2076 = vadd.f32 %v2071, 1.0
    %v2077 = vmul.f32 %v2072, 0.5
    %v2078 = vmul.f32 %v2073, 0.5
    %v2079 = vmul.f32 %v2074, 0.5
    %v2080 = vmul.f32 %v2075, 0.5
    %v2081 = vmul.f32 %v2076, 0.5
    %v2082 = vmul.f32 %v2021, %v2077
    %v2083 = vmul.f32 %v2024, %v2078
    %v2084 = vmul.f32 %v2029, %v2079
    %v2085 = vmul.f32 %v2032, %v2080
    %v2086 = vmul.f32 %v2037, %v2081
    %v2087 = vld [vmem:[%s1 + $0xb8] sm:$0xf]
    %v2088 = vld [vmem:[%s1 + $0xbc] sm:$0xf]
    %v2089 = vld [vmem:[%s1 + $0xc0] sm:$0xf]
    %v2090 = vld [vmem:[%s1 + $0xc4] sm:$0xf]
    %v2091 = vld [vmem:[%s1 + $0xc8] sm:$0xf]
    %v2092 = vld [vmem:[%s1 + $0xcc] sm:$0xf]
    %v2093 = vld [vmem:[%s1 + $0xd0] sm:$0xf]
    %v2094 = vld [vmem:[%s1 + $0xd4] sm:$0xf]
    %v2095 = vld [vmem:[%s1 + $0xd8] sm:$0xf]
    %v2096 = vld [vmem:[%s1 + $0xdc] sm:$0xf]
    %v2097 = vld [vmem:[%s1 + $0xe0] sm:$0xf]
    %v2098 = vld [vmem:[%s1 + $0xe4] sm:$0xf]
    %v2099 = vld [vmem:[%s1 + $0xe8] sm:$0xf]
    %v2100 = vld [vmem:[%s1 + $0xec] sm:$0xf]
    %v2101 = vld [vmem:[%s1 + $0xf0] sm:$0xf]
    %v2102 = vld [vmem:[%s1 + $0xf4] sm:$0xf]
    %v2103 = vpack.c.bf16 %v2083, %v2082
    %v2104 = vpack.c.bf16 %v2085, %v2084
    %v2105 = vpack.c.bf16 %v2086, %v2086
    %v2122 = vunpack.c.l.b16 %v2087
    %v2123 = vunpack.c.l.b16 %v2088
    %v2124 = vunpack.c.l.b16 %v2089
    %v2125 = vunpack.c.l.b16 %v2090
    %v2126 = vunpack.c.l.b16 %v2091
    %v2127 = vunpack.c.l.b16 %v2092
    %v2128 = vunpack.c.l.b16 %v2093
    %v2129 = vunpack.c.l.b16 %v2094
    %v2130 = vunpack.c.l.b16 %v2095
    %v2131 = vunpack.c.l.b16 %v2096
    %v2132 = vunpack.c.l.b16 %v2097
    %v2133 = vunpack.c.l.b16 %v2098
    %v2134 = vunpack.c.l.b16 %v2099
    %v2135 = vunpack.c.l.b16 %v2100
    %v2136 = vunpack.c.l.b16 %v2101
    %v2137 = vunpack.c.l.b16 %v2102
    %v2138 = vpack.c.b16 %v2123, %v2122
    %v2139 = vpack.c.b16 %v2125, %v2124
    %v2140 = vpack.c.b16 %v2127, %v2126
    %v2141 = vpack.c.b16 %v2129, %v2128
    %v2142 = vpack.c.b16 %v2131, %v2130
    %v2143 = vpack.c.b16 %v2133, %v2132
    %v2144 = vpack.c.b16 %v2135, %v2134
    %v2145 = vpack.c.b16 %v2137, %v2136
    %2154 = vmatprep.subr.bf16.mxu0 0
    %2155 = vmatpush1.bf16.msra.mxu0 %v2145
    %2156 = vmatprep.subr.bf16.mxu0 0
    %2157 = vmatpush1.bf16.msra.mxu0 %v2144
    %2158 = vmatprep.subr.bf16.mxu0 0
    %2159 = vmatpush1.bf16.msra.mxu0 %v2143
    %2160 = vmatprep.subr.bf16.mxu0 0
    %2161 = vmatpush1.bf16.msra.mxu0 %v2142
    %2162 = vmatprep.subr.bf16.mxu0 0
    %2163 = vmatpush1.bf16.msra.mxu0 %v2141
    %2164 = vmatprep.subr.bf16.mxu0 0
    %2165 = vmatpush1.bf16.msra.mxu0 %v2140
    %2166 = vmatprep.subr.bf16.mxu0 0
    %2167 = vmatpush1.bf16.msra.mxu0 %v2139
    %2168 = vmatprep.subr.bf16.mxu0 0
    %2169 = vmatpush1.bf16.msra.mxu0 %v2138
    %2170 = vmatprep.subr.bf16.mxu0 0
    %2171 = vmatpush2.bf16.msra.mxu0 0
    %2172 = vmatprep.subr.bf16.mxu0 0
    %2173 = vmatpush2.bf16.msra.mxu0 0
    %2174 = vmatprep.subr.bf16.mxu0 0
    %2175 = vmatpush2.bf16.msra.mxu0 0
    %2176 = vmatprep.subr.bf16.mxu0 0
    %2177 = vmatpush2.bf16.msra.mxu0 0
    %2178 = vmatprep.subr.bf16.mxu0 0
    %2179 = vmatpush2.bf16.msra.mxu0 0
    %2180 = vmatprep.subr.bf16.mxu0 0
    %2181 = vmatpush2.bf16.msra.mxu0 0
    %2182 = vmatprep.subr.bf16.mxu0 0
    %2183 = vmatpush2.bf16.msra.mxu0 0
    %2184 = vmatprep.subr.bf16.mxu0 0
    %2185 = vmatpush2.bf16.msra.mxu0 0
    %2186 = vmatprep.mubr.bf16.mxu0 0
    %2187 = vmatmul.mubr.bf16.gmra.mxu0 %v2103
    %v2188 = vpop.f32.mrf.mxu0
    %v2189 = vadd.f32 0.0, %v2188
    %v2190 = vpop.f32.mrf.mxu0
    %v2191 = vpop.f32.mrf.mxu0
    %v2192 = vpop.f32.mrf.mxu0
    %2193 = vmatprep.mubr.bf16.mxu0 0
    %2194 = vmatmul.mubr.bf16.gmra.mxu0 %v2104
    %v2195 = vpop.f32.mrf.mxu0
    %v2196 = vpop.f32.mrf.mxu0
    %v2197 = vpop.f32.mrf.mxu0
    %v2198 = vpop.f32.mrf.mxu0
    %2199 = vmatprep.mubr.bf16.mxu0 0
    %2200 = vmatmul.mubr.bf16.gmra.mxu0 %v2105
    %v2201 = vpop.f32.mrf.mxu0
    %v2202 = vpop.f32.mrf.mxu0
    %v2203 = vpop.f32.mrf.mxu0
    %v2204 = vpop.f32.mrf.mxu0
    %2205 = vdwg.mxu0
    %v2206 = vadd.f32 %v1863, %v2189
    %v2207 = vld [vmem:[%s2 + $0x20] sm:$0x1]
    %v2208 = vlaneseq
    %v2209 = vshrl.u32 %v2208, 7
    %v2210 = vsub.s32 0, %v2209
    %v2211 = vrot.slane %v2207, %v2210
    %v2212 = vadd.f32 %v2206, %v2211
    %v2213 = vld [vmem:[%s2 + $0x21] sm:$0x1]
    %v2214 = vld [vmem:[%s2 + $0x22] sm:$0x1]
    %v2215 = vsel %vm159, %v2212, 0.0
    %2216 = vadd.xlane.f32.xlu0 %v2215
    %v2217 = vpop.xlane.xlu0 %2216
    %v2218 = vmul.f32 %v2217, %v163
    %v2219 = vsub.f32 %v2212, %v2218
    %v2220 = vmul.f32 %v2219, %v2219
    %v2221 = vsel %vm159, %v2220, 0.0
    %2222 = vadd.xlane.f32.xlu0 %v2221
    %v2223 = vpop.xlane.xlu0 %2222
    %v2224 = vmul.f32 %v2223, %v163
    %v2225 = vadd.f32 %v2224, 1e-06
    %v2226 = vrsqrt.pop %v2225
    %v2227 = vmul.f32 %v2219, %v2226
    %v2228 = vlaneseq
    %v2229 = vshrl.u32 %v2228, 7
    %v2230 = vsub.s32 0, %v2229
    %v2231 = vrot.slane %v2213, %v2230
    %v2232 = vmul.f32 %v2227, %v2231
    %v2233 = vlaneseq
    %v2234 = vshrl.u32 %v2233, 7
    %v2235 = vsub.s32 0, %v2234
    %v2236 = vrot.slane %v2214, %v2235
    %v2237 = vadd.f32 %v2232, %v2236
    %v2238 = vld [vmem:[%s1 + $0xf8] sm:$0xf]
    %v2239 = vld [vmem:[%s1 + $0xfc] sm:$0xf]
    %v2240 = vld [vmem:[%s1 + $0x100] sm:$0xf]
    %v2241 = vld [vmem:[%s1 + $0x104] sm:$0xf]
    %v2242 = vpack.c.bf16 %v2237, %v2237
    %v2243 = vld [vmem:[%s2 + $0x23] sm:$0x1]
    %v2244 = vlaneseq
    %v2245 = vshrl.u32 %v2244, 7
    %v2246 = vsub.s32 0, %v2245
    %v2247 = vrot.slane %v2243, %v2246
    %v2252 = vunpack.c.l.b16 %v2238
    %v2253 = vunpack.c.l.b16 %v2239
    %v2254 = vunpack.c.l.b16 %v2240
    %v2255 = vunpack.c.l.b16 %v2241
    %v2256 = vpack.c.b16 %v2253, %v2252
    %v2257 = vpack.c.b16 %v2255, %v2254
    %v2261 = vsel %vm146, %v2242, 0
    %2263 = vmatprep.subr.bf16.mxu0 0
    %2264 = vmatpush1.bf16.msra.mxu0 0
    %2265 = vmatprep.subr.bf16.mxu0 0
    %2266 = vmatpush1.bf16.msra.mxu0 0
    %2267 = vmatprep.subr.bf16.mxu0 0
    %2268 = vmatpush1.bf16.msra.mxu0 0
    %2269 = vmatprep.subr.bf16.mxu0 0
    %2270 = vmatpush1.bf16.msra.mxu0 0
    %2271 = vmatprep.subr.bf16.mxu0 0
    %2272 = vmatpush1.bf16.msra.mxu0 0
    %2273 = vmatprep.subr.bf16.mxu0 0
    %2274 = vmatpush1.bf16.msra.mxu0 0
    %2275 = vmatprep.subr.bf16.mxu0 0
    %2276 = vmatpush1.bf16.msra.mxu0 %v2257
    %2277 = vmatprep.subr.bf16.mxu0 0
    %2278 = vmatpush1.bf16.msra.mxu0 %v2256
    %2279 = vmatprep.subr.bf16.mxu0 0
    %2280 = vmatpush2.bf16.msra.mxu0 0
    %2281 = vmatprep.subr.bf16.mxu0 0
    %2282 = vmatpush2.bf16.msra.mxu0 0
    %2283 = vmatprep.subr.bf16.mxu0 0
    %2284 = vmatpush2.bf16.msra.mxu0 0
    %2285 = vmatprep.subr.bf16.mxu0 0
    %2286 = vmatpush2.bf16.msra.mxu0 0
    %2287 = vmatprep.subr.bf16.mxu0 0
    %2288 = vmatpush2.bf16.msra.mxu0 0
    %2289 = vmatprep.subr.bf16.mxu0 0
    %2290 = vmatpush2.bf16.msra.mxu0 0
    %2291 = vmatprep.subr.bf16.mxu0 0
    %2292 = vmatpush2.bf16.msra.mxu0 0
    %2293 = vmatprep.subr.bf16.mxu0 0
    %2294 = vmatpush2.bf16.msra.mxu0 0
    %2295 = vmatprep.mubr.bf16.mxu0 0
    %2296 = vmatmul.mubr.bf16.gmra.mxu0 %v2261
    %v2297 = vpop.f32.mrf.mxu0
    %v2298 = vadd.f32 %v2247, %v2297
    %v2299 = vpop.f32.mrf.mxu0
    %v2300 = vpop.f32.mrf.mxu0
    %v2301 = vpop.f32.mrf.mxu0
    %2302 = vdwg.mxu0
    %2303 = vst [vmem:[#allocation2] sm:$0x3] %v2298
    // Predicated region
    $region14: #{_vit_forward.1} parent=1 // pred_check
      _
    $region15: #{_vit_forward.1} parent=1 // pred_check_branch
      %2305 = sbr.rel (0) target = $region17
    $region16: #{_vit_forward.1} parent=1 // pred_region
      %s2307 = ssub.s32 32, 32
      %2308 = vsyncadd [#allocation3], %s2307
      %s2310 = sshll.u32 [#allocation2], 4
      %s2311 = int_to_ptr.vmem [resolvable:$true] %s2310
      %2313 = dma.vmem_to_hbm [thread:$0]  %s2311, 32, %s3, [#allocation3]
    $region17: #{_vit_forward.1} parent=1 // pred_fallthru
      _
    // Predicated region
    $region18: #{_vit_forward.1} parent=1 // pred_check
      _
    $region19: #{_vit_forward.1} parent=1 // pred_check_branch
      %2315 = sbr.rel (0) target = $region21
    $region20: #{_vit_forward.1} parent=1 // pred_region
      %2316 = dma.done [#allocation3], 32
    $region21: #{_vit_forward.1} parent=1 // pred_fallthru
      _
    %2317 = vsyncpa [#allocation3], 1

</llo_original>
